<compile_context>
chip_gen: v7x
topology: tpu7x:2x2x1
jax: 0.10.0
libtpu: 0.0.40
codegen_flags: <defaults>
</compile_context>

<pallas_src>
import jax
import jax.numpy as jnp
from jax.experimental import pallas as pl
from jax.experimental.pallas import tpu as pltpu


DZ_PAD = 128  # lane-dense width for the latent output block


def _cdiv(a, b):
    return (a + b - 1) // b


def _round_up(x, m):
    return _cdiv(x, m) * m


def _choose_tiling(B, batch_tile):
    """Pick the number of grid steps first, then derive the (8-aligned) tile."""
    ntiles = _cdiv(B, batch_tile)
    # Give the second v7x TensorCore a grid step whenever a real split is
    # possible (B > 8); harmless elsewhere (padding stays < one 8-row tile).
    if ntiles == 1 and B > 8:
        ntiles = 2
    TB = _round_up(_cdiv(B, ntiles), 8)
    B_pad = ntiles * TB
    return TB, B_pad


def _sigmoid_eup(logits):
    """sigmoid via EUP exp + approx reciprocal (keeps the epilogue off the VPU)."""
    return pl.reciprocal(1.0 + jnp.exp(-logits), approx=True)


def basic_ae_kernel_z(x_ref, w1_ref, b1_ref, wmid_ref, bmid_ref, w4_ref, b4_ref,
                      y_ref, z_ref):
    """Fused AE forward on one batch tile, emitting both y and the latent z."""
    x = x_ref[...].astype(jnp.bfloat16)                          # cast post-DMA

    # encoder layer 1: bf16 operands, f32 accumulation on the MXU
    h1 = jnp.dot(x, w1_ref[...], preferred_element_type=jnp.float32) + b1_ref[...]
    h1 = jnp.maximum(h1, 0.0)                                    # [TB, DH] f32

    # single 256-wide middle matmul: columns [0:DZ_PAD) = z projection (padded),
    # columns [DZ_PAD:) = fused decoder hidden (w2 @ w3 path).
    mid = jnp.dot(h1.astype(jnp.bfloat16), wmid_ref[...],
                  preferred_element_type=jnp.float32) + bmid_ref[...]
    dz = z_ref.shape[-1]
    z_ref[...] = mid[:, :dz].astype(z_ref.dtype)                 # lane-dense store
    h2 = jnp.maximum(mid[:, dz:], 0.0)                           # [TB, DH]

    # decoder output: bf16 operands, f32 accumulation, sigmoid on the EUP
    logits = jnp.dot(h2.astype(jnp.bfloat16), w4_ref[...],
                     preferred_element_type=jnp.float32) + b4_ref[...]
    y_ref[...] = _sigmoid_eup(logits).astype(y_ref.dtype)


def basic_ae_kernel_noz(x_ref, w1_ref, b1_ref, w23_ref, b23_ref, w4_ref, b4_ref,
                        y_ref):
    """Fused AE forward on one batch tile, y only (extract_z=False path)."""
    x = x_ref[...].astype(jnp.bfloat16)
    h1 = jnp.maximum(
        jnp.dot(x, w1_ref[...], preferred_element_type=jnp.float32) + b1_ref[...],
        0.0)
    h2 = jnp.maximum(
        jnp.dot(h1.astype(jnp.bfloat16), w23_ref[...],
                preferred_element_type=jnp.float32) + b23_ref[...],
        0.0)
    logits = jnp.dot(h2.astype(jnp.bfloat16), w4_ref[...],
                     preferred_element_type=jnp.float32) + b4_ref[...]
    y_ref[...] = _sigmoid_eup(logits).astype(y_ref.dtype)


def basic_ae_forward(x_nchw, params, extract_z=False, batch_tile=512,
                     out_dtype=jnp.bfloat16):
    """Flatten NCHW, run the fused batch-tiled Pallas kernel, reshape back."""
    B, C, H, W = x_nchw.shape
    D_in = C * H * W
    # Do NOT cast x here (that would add an extra HBM pass); the kernel casts
    # to bf16 after the DMA.  If the producer already supplies bf16, the DMA
    # itself is half-size.
    x_flat = x_nchw.reshape(B, D_in)

    (w1, b1), (w2, b2), (w3, b3), (w4, b4) = params
    D_h = w1.shape[1]
    D_z = w2.shape[1]
    assert D_z <= DZ_PAD

    # ---- wrapper-side weight prep (constant-foldable under jit) ----
    w1b = w1.astype(jnp.bfloat16)                                # big weights -> bf16
    w4b = w4.astype(jnp.bfloat16)
    # fuse the two K=32 bottleneck matmuls into one 128x128 weight (f32 prep)
    w23 = (w2 @ w3).astype(jnp.float32)
    b23 = (b2 @ w3 + b3).astype(jnp.float32)

    # ---- batch tiling: tile-count first, (8,128)-aligned tiles ----
    TB, B_pad = _choose_tiling(B, batch_tile)
    if B_pad != B:
        x_flat = jnp.pad(x_flat, ((0, B_pad - B), (0, 0)))
    grid = (B_pad // TB,)
    resident = lambda i: (0, 0)      # weights/biases: same block every step
    batched = lambda i: (i, 0)       # x / y / z: tiled along batch

    out_size = jnp.dtype(out_dtype).itemsize
    x_bytes = B_pad * D_in * x_flat.dtype.itemsize
    y_bytes = B_pad * D_in * out_size
    w_bytes = ((w1b.size + w4b.size) * 2
               + (b1.size + b23.size + b4.size) * 4)

    if extract_z:
        # lane-dense latent: zero-pad D_z -> DZ_PAD so the z store is unmasked,
        # then concatenate with the fused decoder weight into one 256-col RHS.
        w2p = jnp.zeros((D_h, DZ_PAD), jnp.float32).at[:, :D_z].set(w2)
        b2p = jnp.zeros((1, DZ_PAD), jnp.float32).at[:, :D_z].set(b2)
        wmid = jnp.concatenate([w2p, w23], axis=1).astype(jnp.bfloat16)
        bmid = jnp.concatenate([b2p, b23], axis=1)               # f32 bias

        D_mid = DZ_PAD + D_h
        flops = 2 * B_pad * (D_in * D_h + D_h * D_mid + D_h * D_in)
        bytes_accessed = (x_bytes + y_bytes + B_pad * DZ_PAD * out_size
                          + w_bytes + wmid.size * 2 + bmid.size * 4)

        y_flat, z_pad = pl.pallas_call(
            basic_ae_kernel_z,
            out_shape=(
                jax.ShapeDtypeStruct((B_pad, D_in), out_dtype),
                jax.ShapeDtypeStruct((B_pad, DZ_PAD), out_dtype),
            ),
            grid_spec=pltpu.PrefetchScalarGridSpec(
                num_scalar_prefetch=0,
                grid=grid,
                in_specs=[
                    pl.BlockSpec((TB, D_in), batched),       # x
                    pl.BlockSpec((D_in, D_h), resident),     # w1 (bf16)
                    pl.BlockSpec((1, D_h), resident),        # b1
                    pl.BlockSpec((D_h, D_mid), resident),    # [w2_pad | w2@w3] (bf16)
                    pl.BlockSpec((1, D_mid), resident),      # [b2_pad | b2@w3+b3]
                    pl.BlockSpec((D_h, D_in), resident),     # w4 (bf16)
                    pl.BlockSpec((1, D_in), resident),       # b4
                ],
                out_specs=(
                    pl.BlockSpec((TB, D_in), batched),       # y (bf16)
                    pl.BlockSpec((TB, DZ_PAD), batched),     # z (lane-padded, bf16)
                ),
            ),
            compiler_params=pltpu.CompilerParams(
                dimension_semantics=("parallel",),
            ),
            cost_estimate=pl.CostEstimate(
                flops=int(flops),
                transcendentals=int(2 * B_pad * D_in),
                bytes_accessed=int(bytes_accessed),
            ),
        )(x_flat, w1b, b1, wmid, bmid, w4b, b4)

        y = y_flat[:B].reshape(B, C, H, W)
        z = z_pad[:B, :D_z]
        return y, z

    # ---- extract_z=False: no z output, no z projection, no wrapper z slice ----
    w23b = w23.astype(jnp.bfloat16)
    flops = 2 * B_pad * (D_in * D_h + D_h * D_h + D_h * D_in)
    bytes_accessed = x_bytes + y_bytes + w_bytes + w23b.size * 2

    y_flat = pl.pallas_call(
        basic_ae_kernel_noz,
        out_shape=jax.ShapeDtypeStruct((B_pad, D_in), out_dtype),
        grid_spec=pltpu.PrefetchScalarGridSpec(
            num_scalar_prefetch=0,
            grid=grid,
            in_specs=[
                pl.BlockSpec((TB, D_in), batched),           # x
                pl.BlockSpec((D_in, D_h), resident),         # w1 (bf16)
                pl.BlockSpec((1, D_h), resident),            # b1
                pl.BlockSpec((D_h, D_h), resident),          # w2@w3 (bf16)
                pl.BlockSpec((1, D_h), resident),            # b2@w3+b3
                pl.BlockSpec((D_h, D_in), resident),         # w4 (bf16)
                pl.BlockSpec((1, D_in), resident),           # b4
            ],
            out_specs=pl.BlockSpec((TB, D_in), batched),     # y (bf16)
        ),
        compiler_params=pltpu.CompilerParams(
            dimension_semantics=("parallel",),
        ),
        cost_estimate=pl.CostEstimate(
            flops=int(flops),
            transcendentals=int(2 * B_pad * D_in),
            bytes_accessed=int(bytes_accessed),
        ),
    )(x_flat, w1b, b1, w23b, b23, w4b, b4)

    return y_flat[:B].reshape(B, C, H, W)


def make_params(key, d_in, d_hidden, d_z):
    """Deterministic parameter init (Kaiming-ish scaling), weights stored [in, out]."""
    keys = jax.random.split(key, 8)

    def lin(kw, kb, fan_in, fan_out):
        bound = 1.0 / jnp.sqrt(fan_in)
        w = jax.random.uniform(kw, (fan_in, fan_out), jnp.float32, -bound, bound)
        b = jax.random.uniform(kb, (1, fan_out), jnp.float32, -bound, bound)
        return w, b

    p1 = lin(keys[0], keys[1], d_in, d_hidden)      # encoder L1
    p2 = lin(keys[2], keys[3], d_hidden, d_z)       # encoder L2 -> latent
    p3 = lin(keys[4], keys[5], d_z, d_hidden)       # decoder L1
    p4 = lin(keys[6], keys[7], d_hidden, d_in)      # decoder L2 -> reconstruction
    return (p1, p2, p3, p4)


def reference_forward(x_nchw, params):
    """Pure-JAX f32 reference of the same autoencoder (unfused, for sanity checking)."""
    B = x_nchw.shape[0]
    x = x_nchw.reshape(B, -1)
    (w1, b1), (w2, b2), (w3, b3), (w4, b4) = params
    h1 = jnp.maximum(x @ w1 + b1, 0.0)
    z = h1 @ w2 + b2
    h2 = jnp.maximum(z @ w3 + b3, 0.0)
    y = jax.nn.sigmoid(h2 @ w4 + b4)
    return y.reshape(x_nchw.shape), z


if __name__ == "__main__":
    key = jax.random.PRNGKey(0)
    k_x, k_p = jax.random.split(key)

    B, C, H, W = 8, 4, 16, 16          # small NCHW input
    D_in = C * H * W                    # 1024
    D_hidden = 128
    D_z = 32

    x = jax.random.normal(k_x, (B, C, H, W), dtype=jnp.float32)
    params = make_params(k_p, D_in, D_hidden, D_z)

    # extract_z=True path (y, z) and extract_z=False path (y only)
    y, z = basic_ae_forward(x, params, extract_z=True)
    y = jax.block_until_ready(y)
    z = jax.block_until_ready(z)
    y_only = basic_ae_forward(x, params, extract_z=False)
    y_only = jax.block_until_ready(y_only)

    # sanity check against the pure-JAX f32 reference
    # (tolerances account for bf16 weights/activations on the MXU, bf16 output
    #  stores, and the EUP approx-reciprocal sigmoid)
    y_ref, z_ref = reference_forward(x, params)
    assert y.shape == (B, C, H, W) and z.shape == (B, D_z)
    assert y_only.shape == (B, C, H, W)
    assert jnp.allclose(y.astype(jnp.float32), y_ref, atol=2e-2, rtol=2e-2)
    assert jnp.allclose(z.astype(jnp.float32), z_ref, atol=3e-2, rtol=2e-2)
    assert jnp.allclose(y_only.astype(jnp.float32), y_ref, atol=2e-2, rtol=2e-2)

    print("KERNEL_OK")
</pallas_src>

<mosaic_0001>
module attributes {stable_mosaic.version = 11 : i64} {
  func.func @basic_ae_kernel_z(%arg0: i32, %arg1: memref<8x1024xf32, #tpu.memory_space<vmem>>, %arg2: memref<1024x128xbf16, #tpu.memory_space<vmem>>, %arg3: memref<1x128xf32, #tpu.memory_space<vmem>>, %arg4: memref<128x256xbf16, #tpu.memory_space<vmem>>, %arg5: memref<1x256xf32, #tpu.memory_space<vmem>>, %arg6: memref<128x1024xbf16, #tpu.memory_space<vmem>>, %arg7: memref<1x1024xf32, #tpu.memory_space<vmem>>, %arg8: memref<8x1024xbf16, #tpu.memory_space<vmem>>, %arg9: memref<8x128xbf16, #tpu.memory_space<vmem>>) attributes {dimension_semantics = [#tpu.dimension_semantics<parallel>], iteration_bounds = array<i64: 1>, scalar_prefetch = 0 : i64, scratch_operands = 0 : i64, tpu.core_type = #tpu.core_type<tc>, window_params = [{transform_indices = @transform_0, window_bounds = array<i64: 8, 1024>}, {pipeline_mode = #tpu.pipeline_mode<synchronous>, transform_indices = @transform_1, window_bounds = array<i64: 1024, 128>}, {pipeline_mode = #tpu.pipeline_mode<synchronous>, transform_indices = @transform_2, window_bounds = array<i64: 1, 128>}, {pipeline_mode = #tpu.pipeline_mode<synchronous>, transform_indices = @transform_3, window_bounds = array<i64: 128, 256>}, {pipeline_mode = #tpu.pipeline_mode<synchronous>, transform_indices = @transform_4, window_bounds = array<i64: 1, 256>}, {pipeline_mode = #tpu.pipeline_mode<synchronous>, transform_indices = @transform_5, window_bounds = array<i64: 128, 1024>}, {pipeline_mode = #tpu.pipeline_mode<synchronous>, transform_indices = @transform_6, window_bounds = array<i64: 1, 1024>}, {transform_indices = @transform_7, window_bounds = array<i64: 8, 1024>}, {transform_indices = @transform_8, window_bounds = array<i64: 8, 128>}]} {
    %c0 = arith.constant 0 : index
    %c0_0 = arith.constant 0 : index
    %0 = vector.load %arg1[%c0, %c0_0] : memref<8x1024xf32, #tpu.memory_space<vmem>>, vector<8x1024xf32>
    %1 = arith.truncf %0 : vector<8x1024xf32> to vector<8x1024xbf16>
    %c0_1 = arith.constant 0 : index
    %c0_2 = arith.constant 0 : index
    %2 = vector.load %arg2[%c0_1, %c0_2] : memref<1024x128xbf16, #tpu.memory_space<vmem>>, vector<1024x128xbf16>
    %cst = arith.constant dense<0.000000e+00> : vector<8x128xf32>
    %3 = tpu.matmul %1, %2, %cst {dimension_numbers = #tpu.dot_dimension_numbers<[1], [0], [0], [1], [0, 0, 1, 1], [], []>} : vector<8x1024xbf16>, vector<1024x128xbf16>, vector<8x128xf32> -> vector<8x128xf32>
    %c0_3 = arith.constant 0 : index
    %c0_4 = arith.constant 0 : index
    %4 = vector.load %arg3[%c0_3, %c0_4] : memref<1x128xf32, #tpu.memory_space<vmem>>, vector<1x128xf32>
    %5 = vector.broadcast %4 : vector<1x128xf32> to vector<8x128xf32>
    %6 = arith.addf %3, %5 : vector<8x128xf32>
    %cst_5 = arith.constant 0.000000e+00 : f32
    %7 = vector.broadcast %cst_5 : f32 to vector<8x128xf32>
    %8 = arith.maximumf %6, %7 : vector<8x128xf32>
    %9 = arith.truncf %8 : vector<8x128xf32> to vector<8x128xbf16>
    %c0_6 = arith.constant 0 : index
    %c0_7 = arith.constant 0 : index
    %10 = vector.load %arg4[%c0_6, %c0_7] : memref<128x256xbf16, #tpu.memory_space<vmem>>, vector<128x256xbf16>
    %cst_8 = arith.constant dense<0.000000e+00> : vector<8x256xf32>
    %11 = tpu.matmul %9, %10, %cst_8 {dimension_numbers = #tpu.dot_dimension_numbers<[1], [0], [0], [1], [0, 0, 1, 1], [], []>} : vector<8x128xbf16>, vector<128x256xbf16>, vector<8x256xf32> -> vector<8x256xf32>
    %c0_9 = arith.constant 0 : index
    %c0_10 = arith.constant 0 : index
    %12 = vector.load %arg5[%c0_9, %c0_10] : memref<1x256xf32, #tpu.memory_space<vmem>>, vector<1x256xf32>
    %13 = vector.broadcast %12 : vector<1x256xf32> to vector<8x256xf32>
    %14 = arith.addf %11, %13 : vector<8x256xf32>
    %15 = vector.extract_strided_slice %14 {offsets = [0, 0], sizes = [8, 128], strides = [1, 1]} : vector<8x256xf32> to vector<8x128xf32>
    %16 = arith.truncf %15 : vector<8x128xf32> to vector<8x128xbf16>
    %c0_11 = arith.constant 0 : index
    %c0_12 = arith.constant 0 : index
    %17 = vector.load %arg9[%c0_11, %c0_12] : memref<8x128xbf16, #tpu.memory_space<vmem>>, vector<8x128xbf16>
    tpu.vector_store %arg9[%c0_11, %c0_12], %16 {strides = array<i32>} : memref<8x128xbf16, #tpu.memory_space<vmem>>, vector<8x128xbf16>,
    %18 = vector.extract_strided_slice %14 {offsets = [0, 128], sizes = [8, 128], strides = [1, 1]} : vector<8x256xf32> to vector<8x128xf32>
    %cst_13 = arith.constant 0.000000e+00 : f32
    %19 = vector.broadcast %cst_13 : f32 to vector<8x128xf32>
    %20 = arith.maximumf %18, %19 : vector<8x128xf32>
    %21 = arith.truncf %20 : vector<8x128xf32> to vector<8x128xbf16>
    %c0_14 = arith.constant 0 : index
    %c0_15 = arith.constant 0 : index
    %22 = vector.load %arg6[%c0_14, %c0_15] : memref<128x1024xbf16, #tpu.memory_space<vmem>>, vector<128x1024xbf16>
    %cst_16 = arith.constant dense<0.000000e+00> : vector<8x1024xf32>
    %23 = tpu.matmul %21, %22, %cst_16 {dimension_numbers = #tpu.dot_dimension_numbers<[1], [0], [0], [1], [0, 0, 1, 1], [], []>} : vector<8x128xbf16>, vector<128x1024xbf16>, vector<8x1024xf32> -> vector<8x1024xf32>
    %c0_17 = arith.constant 0 : index
    %c0_18 = arith.constant 0 : index
    %24 = vector.load %arg7[%c0_17, %c0_18] : memref<1x1024xf32, #tpu.memory_space<vmem>>, vector<1x1024xf32>
    %25 = vector.broadcast %24 : vector<1x1024xf32> to vector<8x1024xf32>
    %26 = arith.addf %23, %25 : vector<8x1024xf32>
    %cst_19 = arith.constant 0.000000e+00 : f32
    %27 = vector.broadcast %cst_19 : f32 to vector<8x1024xf32>
    %28 = arith.subf %27, %26 : vector<8x1024xf32>
    %29 = math.exp %28 : vector<8x1024xf32>
    %cst_20 = arith.constant 1.000000e+00 : f32
    %30 = vector.broadcast %cst_20 : f32 to vector<8x1024xf32>
    %31 = arith.addf %30, %29 : vector<8x1024xf32>
    %32 = tpu.reciprocal %31 {approx = true} : vector<8x1024xf32> -> vector<8x1024xf32>
    %33 = arith.truncf %32 : vector<8x1024xf32> to vector<8x1024xbf16>
    %c0_21 = arith.constant 0 : index
    %c0_22 = arith.constant 0 : index
    %34 = vector.load %arg8[%c0_21, %c0_22] : memref<8x1024xbf16, #tpu.memory_space<vmem>>, vector<8x1024xbf16>
    tpu.vector_store %arg8[%c0_21, %c0_22], %33 {strides = array<i32>} : memref<8x1024xbf16, #tpu.memory_space<vmem>>, vector<8x1024xbf16>,
    return
  }
  func.func @transform_0(%arg0: i32) -> (i32, i32) {
    %c0_i32 = arith.constant 0 : i32
    %c0_i32_0 = arith.constant 0 : i32
    return %arg0, %c0_i32 : i32, i32
  }
  func.func @transform_1(%arg0: i32) -> (i32, i32) {
    %c0_i32 = arith.constant 0 : i32
    %c0_i32_0 = arith.constant 0 : i32
    %c0_i32_1 = arith.constant 0 : i32
    return %c0_i32, %c0_i32_0 : i32, i32
  }
  func.func @transform_2(%arg0: i32) -> (i32, i32) {
    %c0_i32 = arith.constant 0 : i32
    %c0_i32_0 = arith.constant 0 : i32
    %c0_i32_1 = arith.constant 0 : i32
    return %c0_i32, %c0_i32_0 : i32, i32
  }
  func.func @transform_3(%arg0: i32) -> (i32, i32) {
    %c0_i32 = arith.constant 0 : i32
    %c0_i32_0 = arith.constant 0 : i32
    %c0_i32_1 = arith.constant 0 : i32
    return %c0_i32, %c0_i32_0 : i32, i32
  }
  func.func @transform_4(%arg0: i32) -> (i32, i32) {
    %c0_i32 = arith.constant 0 : i32
    %c0_i32_0 = arith.constant 0 : i32
    %c0_i32_1 = arith.constant 0 : i32
    return %c0_i32, %c0_i32_0 : i32, i32
  }
  func.func @transform_5(%arg0: i32) -> (i32, i32) {
    %c0_i32 = arith.constant 0 : i32
    %c0_i32_0 = arith.constant 0 : i32
    %c0_i32_1 = arith.constant 0 : i32
    return %c0_i32, %c0_i32_0 : i32, i32
  }
  func.func @transform_6(%arg0: i32) -> (i32, i32) {
    %c0_i32 = arith.constant 0 : i32
    %c0_i32_0 = arith.constant 0 : i32
    %c0_i32_1 = arith.constant 0 : i32
    return %c0_i32, %c0_i32_0 : i32, i32
  }
  func.func @transform_7(%arg0: i32) -> (i32, i32) {
    %c0_i32 = arith.constant 0 : i32
    %c0_i32_0 = arith.constant 0 : i32
    return %arg0, %c0_i32 : i32, i32
  }
  func.func @transform_8(%arg0: i32) -> (i32, i32) {
    %c0_i32 = arith.constant 0 : i32
    %c0_i32_0 = arith.constant 0 : i32
    return %arg0, %c0_i32 : i32, i32
  }
}

</mosaic_0001>

<llo_original>
// kernel: tpu_custom_call.1
$region0: #{tpu_custom_call.1}
  #allocation0 [shape = 'u32[]', space=smem, size = 0x4, offset = 0x4, fixed_abs, tag = 'smem constant byte address 0x4 - core index']
  #allocation1 [shape = 'u32[144,128]{1,0:T(1,128)}', space=vmem, size = 0x12000, scoped, tag = 'internal scratch']
  %s0 = inlined_call_operand.hbm [shape: f32[8,1024], index: 0, kind: input, shape index: {}]
  %s1 = inlined_call_operand.hbm [shape: bf16[1024,128], index: 1, kind: input, shape index: {}]
  %s2 = inlined_call_operand.vmem [shape: f32[1,128], index: 2, kind: input, shape index: {}]
  %s3 = inlined_call_operand.hbm [shape: bf16[128,256], index: 3, kind: input, shape index: {}]
  %s4 = inlined_call_operand.vmem [shape: f32[1,256], index: 4, kind: input, shape index: {}]
  %s5 = inlined_call_operand.hbm [shape: bf16[128,1024], index: 5, kind: input, shape index: {}]
  %s6 = inlined_call_operand.vmem [shape: f32[1,1024], index: 6, kind: input, shape index: {}]
  %s7 = inlined_call_operand.hbm [shape: bf16[8,1024], index: 7, kind: output, shape index: {0}]
  %s8 = inlined_call_operand.hbm [shape: bf16[8,128], index: 8, kind: output, shape index: {1}]
  %9 = xla_tuple %s7, %s8
  %s10 = sld [smem:[#allocation0]]
  $region62: #{tpu_custom_call.1} parent=0
    _
  %s12 = ssub.s32 1, %s10
  %s13 = scalar_select 0, %s12, %s10
  $region1: #{tpu_custom_call.1} parent=0
    #allocation2 [shape = 'u8[32768]{0}', space=vmem, size = 0x8000, scoped, tag = 'input window, operand 0, single buffered']
    #allocation3 [shape = 's32[1]{0}', space=sflag, size = 0x4, scoped, tag = 'scoped memory for tpu_custom_call.1']
    #allocation4 [shape = 's32[1]{0}', space=sflag, size = 0x4, scoped, tag = 'scoped memory for tpu_custom_call.1']
    #allocation5 [shape = 'u8[262144]{0}', space=vmem, size = 0x40000, scoped, tag = 'input window, operand 1, single buffered']
    #allocation6 [shape = 's32[1]{0}', space=sflag, size = 0x4, scoped, tag = 'scoped memory for tpu_custom_call.1']
    #allocation7 [shape = 'u8[65536]{0}', space=vmem, size = 0x10000, scoped, tag = 'input window, operand 3, single buffered']
    #allocation8 [shape = 'u8[262144]{0}', space=vmem, size = 0x40000, scoped, tag = 'input window, operand 5, single buffered']
    #allocation9 [shape = 's32[1]{0}', space=sflag, size = 0x4, scoped, tag = 'scoped memory for tpu_custom_call.1']
    #allocation10 [shape = 'u8[16384]{0}', space=vmem, size = 0x4000, scoped, tag = 'output window, operand 0, single buffered']
    #allocation11 [shape = 'u8[2048]{0}', space=vmem, size = 0x800, scoped, tag = 'output window, operand 1, single buffered']
    #allocation12 [shape = 's32[1]{0}', space=sflag, size = 0x4, scoped, tag = 'scoped memory for tpu_custom_call.1']
    %14 = vsyncpa [#allocation3], 0
    %15 = vsyncpa [#allocation6], 0
    %16 = vsyncpa [#allocation9], 0
    %17 = vsyncpa [#allocation4], 0
    %18 = vsyncpa [#allocation12], 0
    // Predicated region
    $region2: #{tpu_custom_call.1} parent=1 // pred_check
      _
    $region3: #{tpu_custom_call.1} parent=1 // pred_check_branch
      %20 = sbr.rel (0) target = $region5
    $region4: #{tpu_custom_call.1} parent=1 // pred_region
      %s22 = ssub.s32 1024, 1024
      %23 = vsyncadd [#allocation3], %s22
      %s25 = sshll.u32 [#allocation2], 4
      %s26 = int_to_ptr.vmem [resolvable:$true] %s25
      %28 = dma.hbm_to_vmem [thread:$0]  %s0, 1024, %s26, [#allocation3]
    $region5: #{tpu_custom_call.1} parent=1 // pred_fallthru
      _
    // Predicated region
    $region6: #{tpu_custom_call.1} parent=1 // pred_check
      _
    $region7: #{tpu_custom_call.1} parent=1 // pred_check_branch
      %30 = sbr.rel (0) target = $region9
    $region8: #{tpu_custom_call.1} parent=1 // pred_region
      %s32 = ssub.s32 8192, 8192
      %33 = vsyncadd [#allocation6], %s32
      %s34 = sshll.u32 [#allocation5], 4
      %s35 = int_to_ptr.vmem [resolvable:$true] %s34
      %40 = dma.hbm_to_vmem [thread:$0]  %s1, 8192, %s35, [#allocation6], 64, 64, 4
    $region9: #{tpu_custom_call.1} parent=1 // pred_fallthru
      _
    // Predicated region
    $region10: #{tpu_custom_call.1} parent=1 // pred_check
      _
    $region11: #{tpu_custom_call.1} parent=1 // pred_check_branch
      %42 = sbr.rel (0) target = $region13
    $region12: #{tpu_custom_call.1} parent=1 // pred_region
      _
    $region13: #{tpu_custom_call.1} parent=1 // pred_fallthru
      _
    // Predicated region
    $region14: #{tpu_custom_call.1} parent=1 // pred_check
      _
    $region15: #{tpu_custom_call.1} parent=1 // pred_check_branch
      %44 = sbr.rel (0) target = $region17
    $region16: #{tpu_custom_call.1} parent=1 // pred_region
      %s46 = ssub.s32 2048, 2048
      %47 = vsyncadd [#allocation6], %s46
      %s48 = sshll.u32 [#allocation7], 4
      %s49 = int_to_ptr.vmem [resolvable:$true] %s48
      %54 = dma.hbm_to_vmem [thread:$0]  %s3, 2048, %s49, [#allocation6], 128, 128, 8
    $region17: #{tpu_custom_call.1} parent=1 // pred_fallthru
      _
    // Predicated region
    $region18: #{tpu_custom_call.1} parent=1 // pred_check
      _
    $region19: #{tpu_custom_call.1} parent=1 // pred_check_branch
      %56 = sbr.rel (0) target = $region21
    $region20: #{tpu_custom_call.1} parent=1 // pred_region
      _
    $region21: #{tpu_custom_call.1} parent=1 // pred_fallthru
      _
    // Predicated region
    $region22: #{tpu_custom_call.1} parent=1 // pred_check
      _
    $region23: #{tpu_custom_call.1} parent=1 // pred_check_branch
      %58 = sbr.rel (0) target = $region25
    $region24: #{tpu_custom_call.1} parent=1 // pred_region
      %s60 = ssub.s32 8192, 8192
      %61 = vsyncadd [#allocation9], %s60
      %s62 = sshll.u32 [#allocation8], 4
      %s63 = int_to_ptr.vmem [resolvable:$true] %s62
      %68 = dma.hbm_to_vmem [thread:$0]  %s5, 8192, %s63, [#allocation9], 512, 512, 32
    $region25: #{tpu_custom_call.1} parent=1 // pred_fallthru
      _
    // Predicated region
    $region26: #{tpu_custom_call.1} parent=1 // pred_check
      _
    $region27: #{tpu_custom_call.1} parent=1 // pred_check_branch
      %70 = sbr.rel (0) target = $region29
    $region28: #{tpu_custom_call.1} parent=1 // pred_region
      _
    $region29: #{tpu_custom_call.1} parent=1 // pred_fallthru
      _
    // Predicated region
    $region30: #{tpu_custom_call.1} parent=1 // pred_check
      _
    $region31: #{tpu_custom_call.1} parent=1 // pred_check_branch
      %72 = sbr.rel (0) target = $region33
    $region32: #{tpu_custom_call.1} parent=1 // pred_region
      %73 = dma.done [#allocation3], 1024
    $region33: #{tpu_custom_call.1} parent=1 // pred_fallthru
      _
    // Predicated region
    $region34: #{tpu_custom_call.1} parent=1 // pred_check
      _
    $region35: #{tpu_custom_call.1} parent=1 // pred_check_branch
      %75 = sbr.rel (0) target = $region37
    $region36: #{tpu_custom_call.1} parent=1 // pred_region
      %76 = dma.done [#allocation6], 8192
    $region37: #{tpu_custom_call.1} parent=1 // pred_fallthru
      _
    // Predicated region
    $region38: #{tpu_custom_call.1} parent=1 // pred_check
      _
    $region39: #{tpu_custom_call.1} parent=1 // pred_check_branch
      %78 = sbr.rel (0) target = $region41
    $region40: #{tpu_custom_call.1} parent=1 // pred_region
      %79 = dma.done [#allocation6], 2048
    $region41: #{tpu_custom_call.1} parent=1 // pred_fallthru
      _
    // Predicated region
    $region42: #{tpu_custom_call.1} parent=1 // pred_check
      _
    $region43: #{tpu_custom_call.1} parent=1 // pred_check_branch
      %81 = sbr.rel (0) target = $region45
    $region44: #{tpu_custom_call.1} parent=1 // pred_region
      %82 = dma.done [#allocation9], 8192
    $region45: #{tpu_custom_call.1} parent=1 // pred_fallthru
      _
    %v84 = vld [vmem:[#allocation2] sm:$0xff]
    %v85 = vld [vmem:[#allocation2 + $0x8] sm:$0xff]
    %v86 = vld [vmem:[#allocation2 + $0x10] sm:$0xff]
    %v87 = vld [vmem:[#allocation2 + $0x18] sm:$0xff]
    %v88 = vld [vmem:[#allocation2 + $0x20] sm:$0xff]
    %v89 = vld [vmem:[#allocation2 + $0x28] sm:$0xff]
    %v90 = vld [vmem:[#allocation2 + $0x30] sm:$0xff]
    %v91 = vld [vmem:[#allocation2 + $0x38] sm:$0xff]
    %v92 = vpack.c.bf16 %v84, %v84
    %v93 = vpack.c.bf16 %v85, %v85
    %v94 = vpack.c.bf16 %v86, %v86
    %v95 = vpack.c.bf16 %v87, %v87
    %v96 = vpack.c.bf16 %v88, %v88
    %v97 = vpack.c.bf16 %v89, %v89
    %v98 = vpack.c.bf16 %v90, %v90
    %v99 = vpack.c.bf16 %v91, %v91
    %v100 = vld [vmem:[#allocation5] sm:$0xf]
    %v101 = vld [vmem:[#allocation5 + $0x4] sm:$0xf]
    %v102 = vld [vmem:[#allocation5 + $0x8] sm:$0xf]
    %v103 = vld [vmem:[#allocation5 + $0xc] sm:$0xf]
    %v104 = vld [vmem:[#allocation5 + $0x10] sm:$0xf]
    %v105 = vld [vmem:[#allocation5 + $0x14] sm:$0xf]
    %v106 = vld [vmem:[#allocation5 + $0x18] sm:$0xf]
    %v107 = vld [vmem:[#allocation5 + $0x1c] sm:$0xf]
    %v108 = vld [vmem:[#allocation5 + $0x20] sm:$0xf]
    %v109 = vld [vmem:[#allocation5 + $0x24] sm:$0xf]
    %v110 = vld [vmem:[#allocation5 + $0x28] sm:$0xf]
    %v111 = vld [vmem:[#allocation5 + $0x2c] sm:$0xf]
    %v112 = vld [vmem:[#allocation5 + $0x30] sm:$0xf]
    %v113 = vld [vmem:[#allocation5 + $0x34] sm:$0xf]
    %v114 = vld [vmem:[#allocation5 + $0x38] sm:$0xf]
    %v115 = vld [vmem:[#allocation5 + $0x3c] sm:$0xf]
    %v116 = vld [vmem:[#allocation5 + $0x40] sm:$0xf]
    %v117 = vld [vmem:[#allocation5 + $0x44] sm:$0xf]
    %v118 = vld [vmem:[#allocation5 + $0x48] sm:$0xf]
    %v119 = vld [vmem:[#allocation5 + $0x4c] sm:$0xf]
    %v120 = vld [vmem:[#allocation5 + $0x50] sm:$0xf]
    %v121 = vld [vmem:[#allocation5 + $0x54] sm:$0xf]
    %v122 = vld [vmem:[#allocation5 + $0x58] sm:$0xf]
    %v123 = vld [vmem:[#allocation5 + $0x5c] sm:$0xf]
    %v124 = vld [vmem:[#allocation5 + $0x60] sm:$0xf]
    %v125 = vld [vmem:[#allocation5 + $0x64] sm:$0xf]
    %v126 = vld [vmem:[#allocation5 + $0x68] sm:$0xf]
    %v127 = vld [vmem:[#allocation5 + $0x6c] sm:$0xf]
    %v128 = vld [vmem:[#allocation5 + $0x70] sm:$0xf]
    %v129 = vld [vmem:[#allocation5 + $0x74] sm:$0xf]
    %v130 = vld [vmem:[#allocation5 + $0x78] sm:$0xf]
    %v131 = vld [vmem:[#allocation5 + $0x7c] sm:$0xf]
    %v132 = vld [vmem:[#allocation5 + $0x80] sm:$0xf]
    %v133 = vld [vmem:[#allocation5 + $0x84] sm:$0xf]
    %v134 = vld [vmem:[#allocation5 + $0x88] sm:$0xf]
    %v135 = vld [vmem:[#allocation5 + $0x8c] sm:$0xf]
    %v136 = vld [vmem:[#allocation5 + $0x90] sm:$0xf]
    %v137 = vld [vmem:[#allocation5 + $0x94] sm:$0xf]
    %v138 = vld [vmem:[#allocation5 + $0x98] sm:$0xf]
    %v139 = vld [vmem:[#allocation5 + $0x9c] sm:$0xf]
    %v140 = vld [vmem:[#allocation5 + $0xa0] sm:$0xf]
    %v141 = vld [vmem:[#allocation5 + $0xa4] sm:$0xf]
    %v142 = vld [vmem:[#allocation5 + $0xa8] sm:$0xf]
    %v143 = vld [vmem:[#allocation5 + $0xac] sm:$0xf]
    %v144 = vld [vmem:[#allocation5 + $0xb0] sm:$0xf]
    %v145 = vld [vmem:[#allocation5 + $0xb4] sm:$0xf]
    %v146 = vld [vmem:[#allocation5 + $0xb8] sm:$0xf]
    %v147 = vld [vmem:[#allocation5 + $0xbc] sm:$0xf]
    %v148 = vld [vmem:[#allocation5 + $0xc0] sm:$0xf]
    %v149 = vld [vmem:[#allocation5 + $0xc4] sm:$0xf]
    %v150 = vld [vmem:[#allocation5 + $0xc8] sm:$0xf]
    %v151 = vld [vmem:[#allocation5 + $0xcc] sm:$0xf]
    %v152 = vld [vmem:[#allocation5 + $0xd0] sm:$0xf]
    %v153 = vld [vmem:[#allocation5 + $0xd4] sm:$0xf]
    %v154 = vld [vmem:[#allocation5 + $0xd8] sm:$0xf]
    %v155 = vld [vmem:[#allocation5 + $0xdc] sm:$0xf]
    %v156 = vld [vmem:[#allocation5 + $0xe0] sm:$0xf]
    %v157 = vld [vmem:[#allocation5 + $0xe4] sm:$0xf]
    %v158 = vld [vmem:[#allocation5 + $0xe8] sm:$0xf]
    %v159 = vld [vmem:[#allocation5 + $0xec] sm:$0xf]
    %v160 = vld [vmem:[#allocation5 + $0xf0] sm:$0xf]
    %v161 = vld [vmem:[#allocation5 + $0xf4] sm:$0xf]
    %v162 = vld [vmem:[#allocation5 + $0xf8] sm:$0xf]
    %v163 = vld [vmem:[#allocation5 + $0xfc] sm:$0xf]
    %v164 = vld [vmem:[#allocation5 + $0x100] sm:$0xf]
    %v165 = vld [vmem:[#allocation5 + $0x104] sm:$0xf]
    %v166 = vld [vmem:[#allocation5 + $0x108] sm:$0xf]
    %v167 = vld [vmem:[#allocation5 + $0x10c] sm:$0xf]
    %v168 = vld [vmem:[#allocation5 + $0x110] sm:$0xf]
    %v169 = vld [vmem:[#allocation5 + $0x114] sm:$0xf]
    %v170 = vld [vmem:[#allocation5 + $0x118] sm:$0xf]
    %v171 = vld [vmem:[#allocation5 + $0x11c] sm:$0xf]
    %v172 = vld [vmem:[#allocation5 + $0x120] sm:$0xf]
    %v173 = vld [vmem:[#allocation5 + $0x124] sm:$0xf]
    %v174 = vld [vmem:[#allocation5 + $0x128] sm:$0xf]
    %v175 = vld [vmem:[#allocation5 + $0x12c] sm:$0xf]
    %v176 = vld [vmem:[#allocation5 + $0x130] sm:$0xf]
    %v177 = vld [vmem:[#allocation5 + $0x134] sm:$0xf]
    %v178 = vld [vmem:[#allocation5 + $0x138] sm:$0xf]
    %v179 = vld [vmem:[#allocation5 + $0x13c] sm:$0xf]
    %v180 = vld [vmem:[#allocation5 + $0x140] sm:$0xf]
    %v181 = vld [vmem:[#allocation5 + $0x144] sm:$0xf]
    %v182 = vld [vmem:[#allocation5 + $0x148] sm:$0xf]
    %v183 = vld [vmem:[#allocation5 + $0x14c] sm:$0xf]
    %v184 = vld [vmem:[#allocation5 + $0x150] sm:$0xf]
    %v185 = vld [vmem:[#allocation5 + $0x154] sm:$0xf]
    %v186 = vld [vmem:[#allocation5 + $0x158] sm:$0xf]
    %v187 = vld [vmem:[#allocation5 + $0x15c] sm:$0xf]
    %v188 = vld [vmem:[#allocation5 + $0x160] sm:$0xf]
    %v189 = vld [vmem:[#allocation5 + $0x164] sm:$0xf]
    %v190 = vld [vmem:[#allocation5 + $0x168] sm:$0xf]
    %v191 = vld [vmem:[#allocation5 + $0x16c] sm:$0xf]
    %v192 = vld [vmem:[#allocation5 + $0x170] sm:$0xf]
    %v193 = vld [vmem:[#allocation5 + $0x174] sm:$0xf]
    %v194 = vld [vmem:[#allocation5 + $0x178] sm:$0xf]
    %v195 = vld [vmem:[#allocation5 + $0x17c] sm:$0xf]
    %v196 = vld [vmem:[#allocation5 + $0x180] sm:$0xf]
    %v197 = vld [vmem:[#allocation5 + $0x184] sm:$0xf]
    %v198 = vld [vmem:[#allocation5 + $0x188] sm:$0xf]
    %v199 = vld [vmem:[#allocation5 + $0x18c] sm:$0xf]
    %v200 = vld [vmem:[#allocation5 + $0x190] sm:$0xf]
    %v201 = vld [vmem:[#allocation5 + $0x194] sm:$0xf]
    %v202 = vld [vmem:[#allocation5 + $0x198] sm:$0xf]
    %v203 = vld [vmem:[#allocation5 + $0x19c] sm:$0xf]
    %v204 = vld [vmem:[#allocation5 + $0x1a0] sm:$0xf]
    %v205 = vld [vmem:[#allocation5 + $0x1a4] sm:$0xf]
    %v206 = vld [vmem:[#allocation5 + $0x1a8] sm:$0xf]
    %v207 = vld [vmem:[#allocation5 + $0x1ac] sm:$0xf]
    %v208 = vld [vmem:[#allocation5 + $0x1b0] sm:$0xf]
    %v209 = vld [vmem:[#allocation5 + $0x1b4] sm:$0xf]
    %v210 = vld [vmem:[#allocation5 + $0x1b8] sm:$0xf]
    %v211 = vld [vmem:[#allocation5 + $0x1bc] sm:$0xf]
    %v212 = vld [vmem:[#allocation5 + $0x1c0] sm:$0xf]
    %v213 = vld [vmem:[#allocation5 + $0x1c4] sm:$0xf]
    %v214 = vld [vmem:[#allocation5 + $0x1c8] sm:$0xf]
    %v215 = vld [vmem:[#allocation5 + $0x1cc] sm:$0xf]
    %v216 = vld [vmem:[#allocation5 + $0x1d0] sm:$0xf]
    %v217 = vld [vmem:[#allocation5 + $0x1d4] sm:$0xf]
    %v218 = vld [vmem:[#allocation5 + $0x1d8] sm:$0xf]
    %v219 = vld [vmem:[#allocation5 + $0x1dc] sm:$0xf]
    %v220 = vld [vmem:[#allocation5 + $0x1e0] sm:$0xf]
    %v221 = vld [vmem:[#allocation5 + $0x1e4] sm:$0xf]
    %v222 = vld [vmem:[#allocation5 + $0x1e8] sm:$0xf]
    %v223 = vld [vmem:[#allocation5 + $0x1ec] sm:$0xf]
    %v224 = vld [vmem:[#allocation5 + $0x1f0] sm:$0xf]
    %v225 = vld [vmem:[#allocation5 + $0x1f4] sm:$0xf]
    %v226 = vld [vmem:[#allocation5 + $0x1f8] sm:$0xf]
    %v227 = vld [vmem:[#allocation5 + $0x1fc] sm:$0xf]
    %v228 = vld [vmem:[%s2] sm:$0x1]
    %v230 = vlaneseq
    %v231 = vshrl.u32 %v230, 7
    %v232 = vsub.s32 0, %v231
    %v233 = vrot.slane %v228, %v232
    %v363 = vunpack.c.l.b16 %v100
    %v364 = vunpack.c.l.b16 %v101
    %v365 = vunpack.c.l.b16 %v102
    %v366 = vunpack.c.l.b16 %v103
    %v367 = vunpack.c.l.b16 %v104
    %v368 = vunpack.c.l.b16 %v105
    %v369 = vunpack.c.l.b16 %v106
    %v370 = vunpack.c.l.b16 %v107
    %v371 = vunpack.c.l.b16 %v108
    %v372 = vunpack.c.l.b16 %v109
    %v373 = vunpack.c.l.b16 %v110
    %v374 = vunpack.c.l.b16 %v111
    %v375 = vunpack.c.l.b16 %v112
    %v376 = vunpack.c.l.b16 %v113
    %v377 = vunpack.c.l.b16 %v114
    %v378 = vunpack.c.l.b16 %v115
    %v379 = vunpack.c.l.b16 %v116
    %v380 = vunpack.c.l.b16 %v117
    %v381 = vunpack.c.l.b16 %v118
    %v382 = vunpack.c.l.b16 %v119
    %v383 = vunpack.c.l.b16 %v120
    %v384 = vunpack.c.l.b16 %v121
    %v385 = vunpack.c.l.b16 %v122
    %v386 = vunpack.c.l.b16 %v123
    %v387 = vunpack.c.l.b16 %v124
    %v388 = vunpack.c.l.b16 %v125
    %v389 = vunpack.c.l.b16 %v126
    %v390 = vunpack.c.l.b16 %v127
    %v391 = vunpack.c.l.b16 %v128
    %v392 = vunpack.c.l.b16 %v129
    %v393 = vunpack.c.l.b16 %v130
    %v394 = vunpack.c.l.b16 %v131
    %v395 = vunpack.c.l.b16 %v132
    %v396 = vunpack.c.l.b16 %v133
    %v397 = vunpack.c.l.b16 %v134
    %v398 = vunpack.c.l.b16 %v135
    %v399 = vunpack.c.l.b16 %v136
    %v400 = vunpack.c.l.b16 %v137
    %v401 = vunpack.c.l.b16 %v138
    %v402 = vunpack.c.l.b16 %v139
    %v403 = vunpack.c.l.b16 %v140
    %v404 = vunpack.c.l.b16 %v141
    %v405 = vunpack.c.l.b16 %v142
    %v406 = vunpack.c.l.b16 %v143
    %v407 = vunpack.c.l.b16 %v144
    %v408 = vunpack.c.l.b16 %v145
    %v409 = vunpack.c.l.b16 %v146
    %v410 = vunpack.c.l.b16 %v147
    %v411 = vunpack.c.l.b16 %v148
    %v412 = vunpack.c.l.b16 %v149
    %v413 = vunpack.c.l.b16 %v150
    %v414 = vunpack.c.l.b16 %v151
    %v415 = vunpack.c.l.b16 %v152
    %v416 = vunpack.c.l.b16 %v153
    %v417 = vunpack.c.l.b16 %v154
    %v418 = vunpack.c.l.b16 %v155
    %v419 = vunpack.c.l.b16 %v156
    %v420 = vunpack.c.l.b16 %v157
    %v421 = vunpack.c.l.b16 %v158
    %v422 = vunpack.c.l.b16 %v159
    %v423 = vunpack.c.l.b16 %v160
    %v424 = vunpack.c.l.b16 %v161
    %v425 = vunpack.c.l.b16 %v162
    %v426 = vunpack.c.l.b16 %v163
    %v427 = vunpack.c.l.b16 %v164
    %v428 = vunpack.c.l.b16 %v165
    %v429 = vunpack.c.l.b16 %v166
    %v430 = vunpack.c.l.b16 %v167
    %v431 = vunpack.c.l.b16 %v168
    %v432 = vunpack.c.l.b16 %v169
    %v433 = vunpack.c.l.b16 %v170
    %v434 = vunpack.c.l.b16 %v171
    %v435 = vunpack.c.l.b16 %v172
    %v436 = vunpack.c.l.b16 %v173
    %v437 = vunpack.c.l.b16 %v174
    %v438 = vunpack.c.l.b16 %v175
    %v439 = vunpack.c.l.b16 %v176
    %v440 = vunpack.c.l.b16 %v177
    %v441 = vunpack.c.l.b16 %v178
    %v442 = vunpack.c.l.b16 %v179
    %v443 = vunpack.c.l.b16 %v180
    %v444 = vunpack.c.l.b16 %v181
    %v445 = vunpack.c.l.b16 %v182
    %v446 = vunpack.c.l.b16 %v183
    %v447 = vunpack.c.l.b16 %v184
    %v448 = vunpack.c.l.b16 %v185
    %v449 = vunpack.c.l.b16 %v186
    %v450 = vunpack.c.l.b16 %v187
    %v451 = vunpack.c.l.b16 %v188
    %v452 = vunpack.c.l.b16 %v189
    %v453 = vunpack.c.l.b16 %v190
    %v454 = vunpack.c.l.b16 %v191
    %v455 = vunpack.c.l.b16 %v192
    %v456 = vunpack.c.l.b16 %v193
    %v457 = vunpack.c.l.b16 %v194
    %v458 = vunpack.c.l.b16 %v195
    %v459 = vunpack.c.l.b16 %v196
    %v460 = vunpack.c.l.b16 %v197
    %v461 = vunpack.c.l.b16 %v198
    %v462 = vunpack.c.l.b16 %v199
    %v463 = vunpack.c.l.b16 %v200
    %v464 = vunpack.c.l.b16 %v201
    %v465 = vunpack.c.l.b16 %v202
    %v466 = vunpack.c.l.b16 %v203
    %v467 = vunpack.c.l.b16 %v204
    %v468 = vunpack.c.l.b16 %v205
    %v469 = vunpack.c.l.b16 %v206
    %v470 = vunpack.c.l.b16 %v207
    %v471 = vunpack.c.l.b16 %v208
    %v472 = vunpack.c.l.b16 %v209
    %v473 = vunpack.c.l.b16 %v210
    %v474 = vunpack.c.l.b16 %v211
    %v475 = vunpack.c.l.b16 %v212
    %v476 = vunpack.c.l.b16 %v213
    %v477 = vunpack.c.l.b16 %v214
    %v478 = vunpack.c.l.b16 %v215
    %v479 = vunpack.c.l.b16 %v216
    %v480 = vunpack.c.l.b16 %v217
    %v481 = vunpack.c.l.b16 %v218
    %v482 = vunpack.c.l.b16 %v219
    %v483 = vunpack.c.l.b16 %v220
    %v484 = vunpack.c.l.b16 %v221
    %v485 = vunpack.c.l.b16 %v222
    %v486 = vunpack.c.l.b16 %v223
    %v487 = vunpack.c.l.b16 %v224
    %v488 = vunpack.c.l.b16 %v225
    %v489 = vunpack.c.l.b16 %v226
    %v490 = vunpack.c.l.b16 %v227
    %v491 = vpack.c.b16 %v364, %v363
    %v492 = vpack.c.b16 %v366, %v365
    %v493 = vpack.c.b16 %v368, %v367
    %v494 = vpack.c.b16 %v370, %v369
    %v495 = vpack.c.b16 %v372, %v371
    %v496 = vpack.c.b16 %v374, %v373
    %v497 = vpack.c.b16 %v376, %v375
    %v498 = vpack.c.b16 %v378, %v377
    %v499 = vpack.c.b16 %v380, %v379
    %v500 = vpack.c.b16 %v382, %v381
    %v501 = vpack.c.b16 %v384, %v383
    %v502 = vpack.c.b16 %v386, %v385
    %v503 = vpack.c.b16 %v388, %v387
    %v504 = vpack.c.b16 %v390, %v389
    %v505 = vpack.c.b16 %v392, %v391
    %v506 = vpack.c.b16 %v394, %v393
    %v507 = vpack.c.b16 %v396, %v395
    %v508 = vpack.c.b16 %v398, %v397
    %v509 = vpack.c.b16 %v400, %v399
    %v510 = vpack.c.b16 %v402, %v401
    %v511 = vpack.c.b16 %v404, %v403
    %v512 = vpack.c.b16 %v406, %v405
    %v513 = vpack.c.b16 %v408, %v407
    %v514 = vpack.c.b16 %v410, %v409
    %v515 = vpack.c.b16 %v412, %v411
    %v516 = vpack.c.b16 %v414, %v413
    %v517 = vpack.c.b16 %v416, %v415
    %v518 = vpack.c.b16 %v418, %v417
    %v519 = vpack.c.b16 %v420, %v419
    %v520 = vpack.c.b16 %v422, %v421
    %v521 = vpack.c.b16 %v424, %v423
    %v522 = vpack.c.b16 %v426, %v425
    %v523 = vpack.c.b16 %v428, %v427
    %v524 = vpack.c.b16 %v430, %v429
    %v525 = vpack.c.b16 %v432, %v431
    %v526 = vpack.c.b16 %v434, %v433
    %v527 = vpack.c.b16 %v436, %v435
    %v528 = vpack.c.b16 %v438, %v437
    %v529 = vpack.c.b16 %v440, %v439
    %v530 = vpack.c.b16 %v442, %v441
    %v531 = vpack.c.b16 %v444, %v443
    %v532 = vpack.c.b16 %v446, %v445
    %v533 = vpack.c.b16 %v448, %v447
    %v534 = vpack.c.b16 %v450, %v449
    %v535 = vpack.c.b16 %v452, %v451
    %v536 = vpack.c.b16 %v454, %v453
    %v537 = vpack.c.b16 %v456, %v455
    %v538 = vpack.c.b16 %v458, %v457
    %v539 = vpack.c.b16 %v460, %v459
    %v540 = vpack.c.b16 %v462, %v461
    %v541 = vpack.c.b16 %v464, %v463
    %v542 = vpack.c.b16 %v466, %v465
    %v543 = vpack.c.b16 %v468, %v467
    %v544 = vpack.c.b16 %v470, %v469
    %v545 = vpack.c.b16 %v472, %v471
    %v546 = vpack.c.b16 %v474, %v473
    %v547 = vpack.c.b16 %v476, %v475
    %v548 = vpack.c.b16 %v478, %v477
    %v549 = vpack.c.b16 %v480, %v479
    %v550 = vpack.c.b16 %v482, %v481
    %v551 = vpack.c.b16 %v484, %v483
    %v552 = vpack.c.b16 %v486, %v485
    %v553 = vpack.c.b16 %v488, %v487
    %v554 = vpack.c.b16 %v490, %v489
    %619 = vmatprep.subr.bf16.mxu0 0
    %620 = vmatpush1.bf16.msra.mxu0 %v491
    %621 = vmatprep.subr.bf16.mxu0 0
    %622 = vmatpush1.bf16.msra.mxu0 %v492
    %623 = vmatprep.subr.bf16.mxu0 0
    %624 = vmatpush1.bf16.msra.mxu0 %v493
    %625 = vmatprep.subr.bf16.mxu0 0
    %626 = vmatpush1.bf16.msra.mxu0 %v494
    %627 = vmatprep.subr.bf16.mxu0 0
    %628 = vmatpush1.bf16.msra.mxu0 %v495
    %629 = vmatprep.subr.bf16.mxu0 0
    %630 = vmatpush1.bf16.msra.mxu0 %v496
    %631 = vmatprep.subr.bf16.mxu0 0
    %632 = vmatpush1.bf16.msra.mxu0 %v497
    %633 = vmatprep.subr.bf16.mxu0 0
    %634 = vmatpush1.bf16.msra.mxu0 %v498
    %635 = vmatprep.subr.bf16.mxu0 0
    %636 = vmatpush1.bf16.msra.mxu0 %v499
    %637 = vmatprep.subr.bf16.mxu0 0
    %638 = vmatpush1.bf16.msra.mxu0 %v500
    %639 = vmatprep.subr.bf16.mxu0 0
    %640 = vmatpush1.bf16.msra.mxu0 %v501
    %641 = vmatprep.subr.bf16.mxu0 0
    %642 = vmatpush1.bf16.msra.mxu0 %v502
    %643 = vmatprep.subr.bf16.mxu0 0
    %644 = vmatpush1.bf16.msra.mxu0 %v503
    %645 = vmatprep.subr.bf16.mxu0 0
    %646 = vmatpush1.bf16.msra.mxu0 %v504
    %647 = vmatprep.subr.bf16.mxu0 0
    %648 = vmatpush1.bf16.msra.mxu0 %v505
    %649 = vmatprep.subr.bf16.mxu0 0
    %650 = vmatpush1.bf16.msra.mxu0 %v506
    %651 = vmatprep.mubr.bf16.mxu0 %v93
    %652 = vmatmul.mubr.bf16.gmra.mrb[0].mxu0 %v92
    %v653 = vpop.f32.mrb[0].mxu0
    %v654 = vadd.f32 %v233, %v653
    %v655 = vpop.f32.mrb[0].mxu0
    %v656 = vpop.f32.mrb[0].mxu0
    %v657 = vpop.f32.mrb[0].mxu0
    %658 = vdwg.mxu0
    %659 = vmatprep.subr.bf16.mxu0 0
    %660 = vmatpush1.bf16.msra.mxu0 %v507
    %661 = vmatprep.subr.bf16.mxu0 0
    %662 = vmatpush1.bf16.msra.mxu0 %v508
    %663 = vmatprep.subr.bf16.mxu0 0
    %664 = vmatpush1.bf16.msra.mxu0 %v509
    %665 = vmatprep.subr.bf16.mxu0 0
    %666 = vmatpush1.bf16.msra.mxu0 %v510
    %667 = vmatprep.subr.bf16.mxu0 0
    %668 = vmatpush1.bf16.msra.mxu0 %v511
    %669 = vmatprep.subr.bf16.mxu0 0
    %670 = vmatpush1.bf16.msra.mxu0 %v512
    %671 = vmatprep.subr.bf16.mxu0 0
    %672 = vmatpush1.bf16.msra.mxu0 %v513
    %673 = vmatprep.subr.bf16.mxu0 0
    %674 = vmatpush1.bf16.msra.mxu0 %v514
    %675 = vmatprep.subr.bf16.mxu0 0
    %676 = vmatpush1.bf16.msra.mxu0 %v515
    %677 = vmatprep.subr.bf16.mxu0 0
    %678 = vmatpush1.bf16.msra.mxu0 %v516
    %679 = vmatprep.subr.bf16.mxu0 0
    %680 = vmatpush1.bf16.msra.mxu0 %v517
    %681 = vmatprep.subr.bf16.mxu0 0
    %682 = vmatpush1.bf16.msra.mxu0 %v518
    %683 = vmatprep.subr.bf16.mxu0 0
    %684 = vmatpush1.bf16.msra.mxu0 %v519
    %685 = vmatprep.subr.bf16.mxu0 0
    %686 = vmatpush1.bf16.msra.mxu0 %v520
    %687 = vmatprep.subr.bf16.mxu0 0
    %688 = vmatpush1.bf16.msra.mxu0 %v521
    %689 = vmatprep.subr.bf16.mxu0 0
    %690 = vmatpush1.bf16.msra.mxu0 %v522
    %691 = vmatprep.mubr.bf16.mxu0 %v95
    %692 = vmatmul.mubr.bf16.gmra.mrb[0].mxu0 %v94
    %v693 = vpop.f32.mrb[0].mxu0
    %v694 = vadd.f32 %v654, %v693
    %v695 = vpop.f32.mrb[0].mxu0
    %v696 = vpop.f32.mrb[0].mxu0
    %v697 = vpop.f32.mrb[0].mxu0
    %698 = vdwg.mxu0
    %699 = vmatprep.subr.bf16.mxu0 0
    %700 = vmatpush1.bf16.msra.mxu0 %v523
    %701 = vmatprep.subr.bf16.mxu0 0
    %702 = vmatpush1.bf16.msra.mxu0 %v524
    %703 = vmatprep.subr.bf16.mxu0 0
    %704 = vmatpush1.bf16.msra.mxu0 %v525
    %705 = vmatprep.subr.bf16.mxu0 0
    %706 = vmatpush1.bf16.msra.mxu0 %v526
    %707 = vmatprep.subr.bf16.mxu0 0
    %708 = vmatpush1.bf16.msra.mxu0 %v527
    %709 = vmatprep.subr.bf16.mxu0 0
    %710 = vmatpush1.bf16.msra.mxu0 %v528
    %711 = vmatprep.subr.bf16.mxu0 0
    %712 = vmatpush1.bf16.msra.mxu0 %v529
    %713 = vmatprep.subr.bf16.mxu0 0
    %714 = vmatpush1.bf16.msra.mxu0 %v530
    %715 = vmatprep.subr.bf16.mxu0 0
    %716 = vmatpush1.bf16.msra.mxu0 %v531
    %717 = vmatprep.subr.bf16.mxu0 0
    %718 = vmatpush1.bf16.msra.mxu0 %v532
    %719 = vmatprep.subr.bf16.mxu0 0
    %720 = vmatpush1.bf16.msra.mxu0 %v533
    %721 = vmatprep.subr.bf16.mxu0 0
    %722 = vmatpush1.bf16.msra.mxu0 %v534
    %723 = vmatprep.subr.bf16.mxu0 0
    %724 = vmatpush1.bf16.msra.mxu0 %v535
    %725 = vmatprep.subr.bf16.mxu0 0
    %726 = vmatpush1.bf16.msra.mxu0 %v536
    %727 = vmatprep.subr.bf16.mxu0 0
    %728 = vmatpush1.bf16.msra.mxu0 %v537
    %729 = vmatprep.subr.bf16.mxu0 0
    %730 = vmatpush1.bf16.msra.mxu0 %v538
    %731 = vmatprep.mubr.bf16.mxu0 %v97
    %732 = vmatmul.mubr.bf16.gmra.mrb[0].mxu0 %v96
    %v733 = vpop.f32.mrb[0].mxu0
    %v734 = vadd.f32 %v694, %v733
    %v735 = vpop.f32.mrb[0].mxu0
    %v736 = vpop.f32.mrb[0].mxu0
    %v737 = vpop.f32.mrb[0].mxu0
    %738 = vdwg.mxu0
    %739 = vmatprep.subr.bf16.mxu0 0
    %740 = vmatpush1.bf16.msra.mxu0 %v539
    %741 = vmatprep.subr.bf16.mxu0 0
    %742 = vmatpush1.bf16.msra.mxu0 %v540
    %743 = vmatprep.subr.bf16.mxu0 0
    %744 = vmatpush1.bf16.msra.mxu0 %v541
    %745 = vmatprep.subr.bf16.mxu0 0
    %746 = vmatpush1.bf16.msra.mxu0 %v542
    %747 = vmatprep.subr.bf16.mxu0 0
    %748 = vmatpush1.bf16.msra.mxu0 %v543
    %749 = vmatprep.subr.bf16.mxu0 0
    %750 = vmatpush1.bf16.msra.mxu0 %v544
    %751 = vmatprep.subr.bf16.mxu0 0
    %752 = vmatpush1.bf16.msra.mxu0 %v545
    %753 = vmatprep.subr.bf16.mxu0 0
    %754 = vmatpush1.bf16.msra.mxu0 %v546
    %755 = vmatprep.subr.bf16.mxu0 0
    %756 = vmatpush1.bf16.msra.mxu0 %v547
    %757 = vmatprep.subr.bf16.mxu0 0
    %758 = vmatpush1.bf16.msra.mxu0 %v548
    %759 = vmatprep.subr.bf16.mxu0 0
    %760 = vmatpush1.bf16.msra.mxu0 %v549
    %761 = vmatprep.subr.bf16.mxu0 0
    %762 = vmatpush1.bf16.msra.mxu0 %v550
    %763 = vmatprep.subr.bf16.mxu0 0
    %764 = vmatpush1.bf16.msra.mxu0 %v551
    %765 = vmatprep.subr.bf16.mxu0 0
    %766 = vmatpush1.bf16.msra.mxu0 %v552
    %767 = vmatprep.subr.bf16.mxu0 0
    %768 = vmatpush1.bf16.msra.mxu0 %v553
    %769 = vmatprep.subr.bf16.mxu0 0
    %770 = vmatpush1.bf16.msra.mxu0 %v554
    %771 = vmatprep.mubr.bf16.mxu0 %v99
    %772 = vmatmul.mubr.bf16.gmra.mrb[0].mxu0 %v98
    %v773 = vpop.f32.mrb[0].mxu0
    %v774 = vadd.f32 %v734, %v773
    %v775 = vpop.f32.mrb[0].mxu0
    %v776 = vpop.f32.mrb[0].mxu0
    %v777 = vpop.f32.mrb[0].mxu0
    %778 = vdwg.mxu0
    %v779 = vmax.f32 %v774, 0.0
    %v780 = vpack.c.bf16 %v779, %v779
    %v781 = vld [vmem:[#allocation7] sm:$0xff]
    %v782 = vld [vmem:[#allocation7 + $0x8] sm:$0xff]
    %v783 = vld [vmem:[#allocation7 + $0x10] sm:$0xff]
    %v784 = vld [vmem:[#allocation7 + $0x18] sm:$0xff]
    %v785 = vld [vmem:[#allocation7 + $0x20] sm:$0xff]
    %v786 = vld [vmem:[#allocation7 + $0x28] sm:$0xff]
    %v787 = vld [vmem:[#allocation7 + $0x30] sm:$0xff]
    %v788 = vld [vmem:[#allocation7 + $0x38] sm:$0xff]
    %v789 = vld [vmem:[#allocation7 + $0x40] sm:$0xff]
    %v790 = vld [vmem:[#allocation7 + $0x48] sm:$0xff]
    %v791 = vld [vmem:[#allocation7 + $0x50] sm:$0xff]
    %v792 = vld [vmem:[#allocation7 + $0x58] sm:$0xff]
    %v793 = vld [vmem:[#allocation7 + $0x60] sm:$0xff]
    %v794 = vld [vmem:[#allocation7 + $0x68] sm:$0xff]
    %v795 = vld [vmem:[#allocation7 + $0x70] sm:$0xff]
    %v796 = vld [vmem:[#allocation7 + $0x78] sm:$0xff]
    %v797 = vld [vmem:[%s4] sm:$0x3]
    %v799 = vlaneseq
    %v800 = vshrl.u32 %v799, 7
    %v801 = vsub.s32 0, %v800
    %v802 = vrot.slane %v797, %v801
    %v803 = vlaneseq
    %v804 = vshrl.u32 %v803, 7
    %v805 = vsub.s32 1, %v804
    %v806 = vrot.slane %v797, %v805
    %v825 = vunpack.c.l.b16 %v781
    %v826 = vunpack.c.h.b16 %v781
    %v827 = vunpack.c.l.b16 %v782
    %v828 = vunpack.c.h.b16 %v782
    %v829 = vunpack.c.l.b16 %v783
    %v830 = vunpack.c.h.b16 %v783
    %v831 = vunpack.c.l.b16 %v784
    %v832 = vunpack.c.h.b16 %v784
    %v833 = vunpack.c.l.b16 %v785
    %v834 = vunpack.c.h.b16 %v785
    %v835 = vunpack.c.l.b16 %v786
    %v836 = vunpack.c.h.b16 %v786
    %v837 = vunpack.c.l.b16 %v787
    %v838 = vunpack.c.h.b16 %v787
    %v839 = vunpack.c.l.b16 %v788
    %v840 = vunpack.c.h.b16 %v788
    %v841 = vunpack.c.l.b16 %v789
    %v842 = vunpack.c.h.b16 %v789
    %v843 = vunpack.c.l.b16 %v790
    %v844 = vunpack.c.h.b16 %v790
    %v845 = vunpack.c.l.b16 %v791
    %v846 = vunpack.c.h.b16 %v791
    %v847 = vunpack.c.l.b16 %v792
    %v848 = vunpack.c.h.b16 %v792
    %v849 = vunpack.c.l.b16 %v793
    %v850 = vunpack.c.h.b16 %v793
    %v851 = vunpack.c.l.b16 %v794
    %v852 = vunpack.c.h.b16 %v794
    %v853 = vunpack.c.l.b16 %v795
    %v854 = vunpack.c.h.b16 %v795
    %v855 = vunpack.c.l.b16 %v796
    %v856 = vunpack.c.h.b16 %v796
    %v857 = vpack.c.b16 %v827, %v825
    %v858 = vpack.c.b16 %v828, %v826
    %v859 = vpack.c.b16 %v831, %v829
    %v860 = vpack.c.b16 %v832, %v830
    %v861 = vpack.c.b16 %v835, %v833
    %v862 = vpack.c.b16 %v836, %v834
    %v863 = vpack.c.b16 %v839, %v837
    %v864 = vpack.c.b16 %v840, %v838
    %v865 = vpack.c.b16 %v843, %v841
    %v866 = vpack.c.b16 %v844, %v842
    %v867 = vpack.c.b16 %v847, %v845
    %v868 = vpack.c.b16 %v848, %v846
    %v869 = vpack.c.b16 %v851, %v849
    %v870 = vpack.c.b16 %v852, %v850
    %v871 = vpack.c.b16 %v855, %v853
    %v872 = vpack.c.b16 %v856, %v854
    %889 = vmatprep.subr.bf16.mxu0 %v858
    %890 = vmatpush1.bf16.msra.mxu0 %v857
    %891 = vmatprep.subr.bf16.mxu0 %v860
    %892 = vmatpush1.bf16.msra.mxu0 %v859
    %893 = vmatprep.subr.bf16.mxu0 %v862
    %894 = vmatpush1.bf16.msra.mxu0 %v861
    %895 = vmatprep.subr.bf16.mxu0 %v864
    %896 = vmatpush1.bf16.msra.mxu0 %v863
    %897 = vmatprep.subr.bf16.mxu0 %v866
    %898 = vmatpush1.bf16.msra.mxu0 %v865
    %899 = vmatprep.subr.bf16.mxu0 %v868
    %900 = vmatpush1.bf16.msra.mxu0 %v867
    %901 = vmatprep.subr.bf16.mxu0 %v870
    %902 = vmatpush1.bf16.msra.mxu0 %v869
    %903 = vmatprep.subr.bf16.mxu0 %v872
    %904 = vmatpush1.bf16.msra.mxu0 %v871
    %905 = vmatprep.subr.bf16.mxu0 0
    %906 = vmatpush1.bf16.msra.mxu0 0
    %907 = vmatprep.subr.bf16.mxu0 0
    %908 = vmatpush1.bf16.msra.mxu0 0
    %909 = vmatprep.subr.bf16.mxu0 0
    %910 = vmatpush1.bf16.msra.mxu0 0
    %911 = vmatprep.subr.bf16.mxu0 0
    %912 = vmatpush1.bf16.msra.mxu0 0
    %913 = vmatprep.subr.bf16.mxu0 0
    %914 = vmatpush1.bf16.msra.mxu0 0
    %915 = vmatprep.subr.bf16.mxu0 0
    %916 = vmatpush1.bf16.msra.mxu0 0
    %917 = vmatprep.subr.bf16.mxu0 0
    %918 = vmatpush1.bf16.msra.mxu0 0
    %919 = vmatprep.subr.bf16.mxu0 0
    %920 = vmatpush1.bf16.msra.mxu0 0
    %921 = vmatprep.mubr.bf16.mxu0 0
    %922 = vmatmul.mubr.bf16.gmra.mrb[0].mxu0 %v780
    %v923 = vpop.f32.mrb[0].mxu0
    %v924 = vadd.f32 %v802, %v923
    %v925 = vpop.f32.mrb[0].mxu0
    %v926 = vadd.f32 %v806, %v925
    %v927 = vpop.f32.mrb[0].mxu0
    %v928 = vpop.f32.mrb[0].mxu0
    %929 = vdwg.mxu0
    %v930 = vpack.c.bf16 %v924, %v924
    %931 = vst [vmem:[#allocation11] sm:$0xf] %v930
    %v932 = vmax.f32 %v926, 0.0
    %v933 = vpack.c.bf16 %v932, %v932
    %v934 = vld [vmem:[#allocation8] sm:$0xff]
    %v935 = vld [vmem:[#allocation8 + $0x8] sm:$0xff]
    %v936 = vld [vmem:[#allocation8 + $0x10] sm:$0xff]
    %v937 = vld [vmem:[#allocation8 + $0x18] sm:$0xff]
    %v938 = vld [vmem:[#allocation8 + $0x20] sm:$0xff]
    %v939 = vld [vmem:[#allocation8 + $0x28] sm:$0xff]
    %v940 = vld [vmem:[#allocation8 + $0x30] sm:$0xff]
    %v941 = vld [vmem:[#allocation8 + $0x38] sm:$0xff]
    %v942 = vld [vmem:[#allocation8 + $0x40] sm:$0xff]
    %v943 = vld [vmem:[#allocation8 + $0x48] sm:$0xff]
    %v944 = vld [vmem:[#allocation8 + $0x50] sm:$0xff]
    %v945 = vld [vmem:[#allocation8 + $0x58] sm:$0xff]
    %v946 = vld [vmem:[#allocation8 + $0x60] sm:$0xff]
    %v947 = vld [vmem:[#allocation8 + $0x68] sm:$0xff]
    %v948 = vld [vmem:[#allocation8 + $0x70] sm:$0xff]
    %v949 = vld [vmem:[#allocation8 + $0x78] sm:$0xff]
    %v950 = vld [vmem:[#allocation8 + $0x80] sm:$0xff]
    %v951 = vld [vmem:[#allocation8 + $0x88] sm:$0xff]
    %v952 = vld [vmem:[#allocation8 + $0x90] sm:$0xff]
    %v953 = vld [vmem:[#allocation8 + $0x98] sm:$0xff]
    %v954 = vld [vmem:[#allocation8 + $0xa0] sm:$0xff]
    %v955 = vld [vmem:[#allocation8 + $0xa8] sm:$0xff]
    %v956 = vld [vmem:[#allocation8 + $0xb0] sm:$0xff]
    %v957 = vld [vmem:[#allocation8 + $0xb8] sm:$0xff]
    %v958 = vld [vmem:[#allocation8 + $0xc0] sm:$0xff]
    %v959 = vld [vmem:[#allocation8 + $0xc8] sm:$0xff]
    %v960 = vld [vmem:[#allocation8 + $0xd0] sm:$0xff]
    %v961 = vld [vmem:[#allocation8 + $0xd8] sm:$0xff]
    %v962 = vld [vmem:[#allocation8 + $0xe0] sm:$0xff]
    %v963 = vld [vmem:[#allocation8 + $0xe8] sm:$0xff]
    %v964 = vld [vmem:[#allocation8 + $0xf0] sm:$0xff]
    %v965 = vld [vmem:[#allocation8 + $0xf8] sm:$0xff]
    %v966 = vld [vmem:[#allocation8 + $0x100] sm:$0xff]
    %v967 = vld [vmem:[#allocation8 + $0x108] sm:$0xff]
    %v968 = vld [vmem:[#allocation8 + $0x110] sm:$0xff]
    %v969 = vld [vmem:[#allocation8 + $0x118] sm:$0xff]
    %v970 = vld [vmem:[#allocation8 + $0x120] sm:$0xff]
    %v971 = vld [vmem:[#allocation8 + $0x128] sm:$0xff]
    %v972 = vld [vmem:[#allocation8 + $0x130] sm:$0xff]
    %v973 = vld [vmem:[#allocation8 + $0x138] sm:$0xff]
    %v974 = vld [vmem:[#allocation8 + $0x140] sm:$0xff]
    %v975 = vld [vmem:[#allocation8 + $0x148] sm:$0xff]
    %v976 = vld [vmem:[#allocation8 + $0x150] sm:$0xff]
    %v977 = vld [vmem:[#allocation8 + $0x158] sm:$0xff]
    %v978 = vld [vmem:[#allocation8 + $0x160] sm:$0xff]
    %v979 = vld [vmem:[#allocation8 + $0x168] sm:$0xff]
    %v980 = vld [vmem:[#allocation8 + $0x170] sm:$0xff]
    %v981 = vld [vmem:[#allocation8 + $0x178] sm:$0xff]
    %v982 = vld [vmem:[#allocation8 + $0x180] sm:$0xff]
    %v983 = vld [vmem:[#allocation8 + $0x188] sm:$0xff]
    %v984 = vld [vmem:[#allocation8 + $0x190] sm:$0xff]
    %v985 = vld [vmem:[#allocation8 + $0x198] sm:$0xff]
    %v986 = vld [vmem:[#allocation8 + $0x1a0] sm:$0xff]
    %v987 = vld [vmem:[#allocation8 + $0x1a8] sm:$0xff]
    %v988 = vld [vmem:[#allocation8 + $0x1b0] sm:$0xff]
    %v989 = vld [vmem:[#allocation8 + $0x1b8] sm:$0xff]
    %v990 = vld [vmem:[#allocation8 + $0x1c0] sm:$0xff]
    %v991 = vld [vmem:[#allocation8 + $0x1c8] sm:$0xff]
    %v992 = vld [vmem:[#allocation8 + $0x1d0] sm:$0xff]
    %v993 = vld [vmem:[#allocation8 + $0x1d8] sm:$0xff]
    %v994 = vld [vmem:[#allocation8 + $0x1e0] sm:$0xff]
    %v995 = vld [vmem:[#allocation8 + $0x1e8] sm:$0xff]
    %v996 = vld [vmem:[#allocation8 + $0x1f0] sm:$0xff]
    %v997 = vld [vmem:[#allocation8 + $0x1f8] sm:$0xff]
    %v998 = vld [vmem:[%s6] sm:$0xff]
    %v1000 = vlaneseq
    %v1001 = vshrl.u32 %v1000, 7
    %v1002 = vsub.s32 0, %v1001
    %v1003 = vrot.slane %v998, %v1002
    %v1004 = vlaneseq
    %v1005 = vshrl.u32 %v1004, 7
    %v1006 = vsub.s32 1, %v1005
    %v1007 = vrot.slane %v998, %v1006
    %v1008 = vlaneseq
    %v1009 = vshrl.u32 %v1008, 7
    %v1010 = vsub.s32 2, %v1009
    %v1011 = vrot.slane %v998, %v1010
    %v1012 = vlaneseq
    %v1013 = vshrl.u32 %v1012, 7
    %v1014 = vsub.s32 3, %v1013
    %v1015 = vrot.slane %v998, %v1014
    %v1016 = vlaneseq
    %v1017 = vshrl.u32 %v1016, 7
    %v1018 = vsub.s32 4, %v1017
    %v1019 = vrot.slane %v998, %v1018
    %v1020 = vlaneseq
    %v1021 = vshrl.u32 %v1020, 7
    %v1022 = vsub.s32 5, %v1021
    %v1023 = vrot.slane %v998, %v1022
    %v1024 = vlaneseq
    %v1025 = vshrl.u32 %v1024, 7
    %v1026 = vsub.s32 6, %v1025
    %v1027 = vrot.slane %v998, %v1026
    %v1028 = vlaneseq
    %v1029 = vshrl.u32 %v1028, 7
    %v1030 = vsub.s32 7, %v1029
    %v1031 = vrot.slane %v998, %v1030
    %v1104 = vunpack.c.l.b16 %v934
    %v1105 = vunpack.c.h.b16 %v934
    %v1106 = vunpack.c.l.b16 %v935
    %v1107 = vunpack.c.h.b16 %v935
    %v1108 = vunpack.c.l.b16 %v936
    %v1109 = vunpack.c.h.b16 %v936
    %v1110 = vunpack.c.l.b16 %v937
    %v1111 = vunpack.c.h.b16 %v937
    %v1112 = vunpack.c.l.b16 %v938
    %v1113 = vunpack.c.h.b16 %v938
    %v1114 = vunpack.c.l.b16 %v939
    %v1115 = vunpack.c.h.b16 %v939
    %v1116 = vunpack.c.l.b16 %v940
    %v1117 = vunpack.c.h.b16 %v940
    %v1118 = vunpack.c.l.b16 %v941
    %v1119 = vunpack.c.h.b16 %v941
    %v1120 = vunpack.c.l.b16 %v942
    %v1121 = vunpack.c.h.b16 %v942
    %v1122 = vunpack.c.l.b16 %v943
    %v1123 = vunpack.c.h.b16 %v943
    %v1124 = vunpack.c.l.b16 %v944
    %v1125 = vunpack.c.h.b16 %v944
    %v1126 = vunpack.c.l.b16 %v945
    %v1127 = vunpack.c.h.b16 %v945
    %v1128 = vunpack.c.l.b16 %v946
    %v1129 = vunpack.c.h.b16 %v946
    %v1130 = vunpack.c.l.b16 %v947
    %v1131 = vunpack.c.h.b16 %v947
    %v1132 = vunpack.c.l.b16 %v948
    %v1133 = vunpack.c.h.b16 %v948
    %v1134 = vunpack.c.l.b16 %v949
    %v1135 = vunpack.c.h.b16 %v949
    %v1136 = vunpack.c.l.b16 %v950
    %v1137 = vunpack.c.h.b16 %v950
    %v1138 = vunpack.c.l.b16 %v951
    %v1139 = vunpack.c.h.b16 %v951
    %v1140 = vunpack.c.l.b16 %v952
    %v1141 = vunpack.c.h.b16 %v952
    %v1142 = vunpack.c.l.b16 %v953
    %v1143 = vunpack.c.h.b16 %v953
    %v1144 = vunpack.c.l.b16 %v954
    %v1145 = vunpack.c.h.b16 %v954
    %v1146 = vunpack.c.l.b16 %v955
    %v1147 = vunpack.c.h.b16 %v955
    %v1148 = vunpack.c.l.b16 %v956
    %v1149 = vunpack.c.h.b16 %v956
    %v1150 = vunpack.c.l.b16 %v957
    %v1151 = vunpack.c.h.b16 %v957
    %v1152 = vunpack.c.l.b16 %v958
    %v1153 = vunpack.c.h.b16 %v958
    %v1154 = vunpack.c.l.b16 %v959
    %v1155 = vunpack.c.h.b16 %v959
    %v1156 = vunpack.c.l.b16 %v960
    %v1157 = vunpack.c.h.b16 %v960
    %v1158 = vunpack.c.l.b16 %v961
    %v1159 = vunpack.c.h.b16 %v961
    %v1160 = vunpack.c.l.b16 %v962
    %v1161 = vunpack.c.h.b16 %v962
    %v1162 = vunpack.c.l.b16 %v963
    %v1163 = vunpack.c.h.b16 %v963
    %v1164 = vunpack.c.l.b16 %v964
    %v1165 = vunpack.c.h.b16 %v964
    %v1166 = vunpack.c.l.b16 %v965
    %v1167 = vunpack.c.h.b16 %v965
    %v1168 = vunpack.c.l.b16 %v966
    %v1169 = vunpack.c.h.b16 %v966
    %v1170 = vunpack.c.l.b16 %v967
    %v1171 = vunpack.c.h.b16 %v967
    %v1172 = vunpack.c.l.b16 %v968
    %v1173 = vunpack.c.h.b16 %v968
    %v1174 = vunpack.c.l.b16 %v969
    %v1175 = vunpack.c.h.b16 %v969
    %v1176 = vunpack.c.l.b16 %v970
    %v1177 = vunpack.c.h.b16 %v970
    %v1178 = vunpack.c.l.b16 %v971
    %v1179 = vunpack.c.h.b16 %v971
    %v1180 = vunpack.c.l.b16 %v972
    %v1181 = vunpack.c.h.b16 %v972
    %v1182 = vunpack.c.l.b16 %v973
    %v1183 = vunpack.c.h.b16 %v973
    %v1184 = vunpack.c.l.b16 %v974
    %v1185 = vunpack.c.h.b16 %v974
    %v1186 = vunpack.c.l.b16 %v975
    %v1187 = vunpack.c.h.b16 %v975
    %v1188 = vunpack.c.l.b16 %v976
    %v1189 = vunpack.c.h.b16 %v976
    %v1190 = vunpack.c.l.b16 %v977
    %v1191 = vunpack.c.h.b16 %v977
    %v1192 = vunpack.c.l.b16 %v978
    %v1193 = vunpack.c.h.b16 %v978
    %v1194 = vunpack.c.l.b16 %v979
    %v1195 = vunpack.c.h.b16 %v979
    %v1196 = vunpack.c.l.b16 %v980
    %v1197 = vunpack.c.h.b16 %v980
    %v1198 = vunpack.c.l.b16 %v981
    %v1199 = vunpack.c.h.b16 %v981
    %v1200 = vunpack.c.l.b16 %v982
    %v1201 = vunpack.c.h.b16 %v982
    %v1202 = vunpack.c.l.b16 %v983
    %v1203 = vunpack.c.h.b16 %v983
    %v1204 = vunpack.c.l.b16 %v984
    %v1205 = vunpack.c.h.b16 %v984
    %v1206 = vunpack.c.l.b16 %v985
    %v1207 = vunpack.c.h.b16 %v985
    %v1208 = vunpack.c.l.b16 %v986
    %v1209 = vunpack.c.h.b16 %v986
    %v1210 = vunpack.c.l.b16 %v987
    %v1211 = vunpack.c.h.b16 %v987
    %v1212 = vunpack.c.l.b16 %v988
    %v1213 = vunpack.c.h.b16 %v988
    %v1214 = vunpack.c.l.b16 %v989
    %v1215 = vunpack.c.h.b16 %v989
    %v1216 = vunpack.c.l.b16 %v990
    %v1217 = vunpack.c.h.b16 %v990
    %v1218 = vunpack.c.l.b16 %v991
    %v1219 = vunpack.c.h.b16 %v991
    %v1220 = vunpack.c.l.b16 %v992
    %v1221 = vunpack.c.h.b16 %v992
    %v1222 = vunpack.c.l.b16 %v993
    %v1223 = vunpack.c.h.b16 %v993
    %v1224 = vunpack.c.l.b16 %v994
    %v1225 = vunpack.c.h.b16 %v994
    %v1226 = vunpack.c.l.b16 %v995
    %v1227 = vunpack.c.h.b16 %v995
    %v1228 = vunpack.c.l.b16 %v996
    %v1229 = vunpack.c.h.b16 %v996
    %v1230 = vunpack.c.l.b16 %v997
    %v1231 = vunpack.c.h.b16 %v997
    %v1232 = vpack.c.b16 %v1112, %v1104
    %v1233 = vpack.c.b16 %v1113, %v1105
    %v1234 = vpack.c.b16 %v1114, %v1106
    %v1235 = vpack.c.b16 %v1115, %v1107
    %v1236 = vpack.c.b16 %v1116, %v1108
    %v1237 = vpack.c.b16 %v1117, %v1109
    %v1238 = vpack.c.b16 %v1118, %v1110
    %v1239 = vpack.c.b16 %v1119, %v1111
    %v1240 = vpack.c.b16 %v1128, %v1120
    %v1241 = vpack.c.b16 %v1129, %v1121
    %v1242 = vpack.c.b16 %v1130, %v1122
    %v1243 = vpack.c.b16 %v1131, %v1123
    %v1244 = vpack.c.b16 %v1132, %v1124
    %v1245 = vpack.c.b16 %v1133, %v1125
    %v1246 = vpack.c.b16 %v1134, %v1126
    %v1247 = vpack.c.b16 %v1135, %v1127
    %v1248 = vpack.c.b16 %v1144, %v1136
    %v1249 = vpack.c.b16 %v1145, %v1137
    %v1250 = vpack.c.b16 %v1146, %v1138
    %v1251 = vpack.c.b16 %v1147, %v1139
    %v1252 = vpack.c.b16 %v1148, %v1140
    %v1253 = vpack.c.b16 %v1149, %v1141
    %v1254 = vpack.c.b16 %v1150, %v1142
    %v1255 = vpack.c.b16 %v1151, %v1143
    %v1256 = vpack.c.b16 %v1160, %v1152
    %v1257 = vpack.c.b16 %v1161, %v1153
    %v1258 = vpack.c.b16 %v1162, %v1154
    %v1259 = vpack.c.b16 %v1163, %v1155
    %v1260 = vpack.c.b16 %v1164, %v1156
    %v1261 = vpack.c.b16 %v1165, %v1157
    %v1262 = vpack.c.b16 %v1166, %v1158
    %v1263 = vpack.c.b16 %v1167, %v1159
    %v1264 = vpack.c.b16 %v1176, %v1168
    %v1265 = vpack.c.b16 %v1177, %v1169
    %v1266 = vpack.c.b16 %v1178, %v1170
    %v1267 = vpack.c.b16 %v1179, %v1171
    %v1268 = vpack.c.b16 %v1180, %v1172
    %v1269 = vpack.c.b16 %v1181, %v1173
    %v1270 = vpack.c.b16 %v1182, %v1174
    %v1271 = vpack.c.b16 %v1183, %v1175
    %v1272 = vpack.c.b16 %v1192, %v1184
    %v1273 = vpack.c.b16 %v1193, %v1185
    %v1274 = vpack.c.b16 %v1194, %v1186
    %v1275 = vpack.c.b16 %v1195, %v1187
    %v1276 = vpack.c.b16 %v1196, %v1188
    %v1277 = vpack.c.b16 %v1197, %v1189
    %v1278 = vpack.c.b16 %v1198, %v1190
    %v1279 = vpack.c.b16 %v1199, %v1191
    %v1280 = vpack.c.b16 %v1208, %v1200
    %v1281 = vpack.c.b16 %v1209, %v1201
    %v1282 = vpack.c.b16 %v1210, %v1202
    %v1283 = vpack.c.b16 %v1211, %v1203
    %v1284 = vpack.c.b16 %v1212, %v1204
    %v1285 = vpack.c.b16 %v1213, %v1205
    %v1286 = vpack.c.b16 %v1214, %v1206
    %v1287 = vpack.c.b16 %v1215, %v1207
    %v1288 = vpack.c.b16 %v1224, %v1216
    %v1289 = vpack.c.b16 %v1225, %v1217
    %v1290 = vpack.c.b16 %v1226, %v1218
    %v1291 = vpack.c.b16 %v1227, %v1219
    %v1292 = vpack.c.b16 %v1228, %v1220
    %v1293 = vpack.c.b16 %v1229, %v1221
    %v1294 = vpack.c.b16 %v1230, %v1222
    %v1295 = vpack.c.b16 %v1231, %v1223
    %1360 = vmatprep.subr.bf16.mxu0 %v1233
    %1361 = vmatpush1.bf16.msra.mxu0 %v1232
    %1362 = vmatprep.subr.bf16.mxu0 %v1241
    %1363 = vmatpush1.bf16.msra.mxu0 %v1240
    %1364 = vmatprep.subr.bf16.mxu0 %v1249
    %1365 = vmatpush1.bf16.msra.mxu0 %v1248
    %1366 = vmatprep.subr.bf16.mxu0 %v1257
    %1367 = vmatpush1.bf16.msra.mxu0 %v1256
    %1368 = vmatprep.subr.bf16.mxu0 %v1265
    %1369 = vmatpush1.bf16.msra.mxu0 %v1264
    %1370 = vmatprep.subr.bf16.mxu0 %v1273
    %1371 = vmatpush1.bf16.msra.mxu0 %v1272
    %1372 = vmatprep.subr.bf16.mxu0 %v1281
    %1373 = vmatpush1.bf16.msra.mxu0 %v1280
    %1374 = vmatprep.subr.bf16.mxu0 %v1289
    %1375 = vmatpush1.bf16.msra.mxu0 %v1288
    %1376 = vmatprep.subr.bf16.mxu0 0
    %1377 = vmatpush1.bf16.msra.mxu0 0
    %1378 = vmatprep.subr.bf16.mxu0 0
    %1379 = vmatpush1.bf16.msra.mxu0 0
    %1380 = vmatprep.subr.bf16.mxu0 0
    %1381 = vmatpush1.bf16.msra.mxu0 0
    %1382 = vmatprep.subr.bf16.mxu0 0
    %1383 = vmatpush1.bf16.msra.mxu0 0
    %1384 = vmatprep.subr.bf16.mxu0 0
    %1385 = vmatpush1.bf16.msra.mxu0 0
    %1386 = vmatprep.subr.bf16.mxu0 0
    %1387 = vmatpush1.bf16.msra.mxu0 0
    %1388 = vmatprep.subr.bf16.mxu0 0
    %1389 = vmatpush1.bf16.msra.mxu0 0
    %1390 = vmatprep.subr.bf16.mxu0 0
    %1391 = vmatpush1.bf16.msra.mxu0 0
    %1392 = vmatprep.mubr.bf16.mxu0 0
    %1393 = vmatmul.mubr.bf16.gmra.mrb[0].mxu0 %v933
    %v1394 = vpop.f32.mrb[0].mxu0
    %v1395 = vadd.f32 %v1003, %v1394
    %v1396 = vpop.f32.mrb[0].mxu0
    %v1397 = vadd.f32 %v1007, %v1396
    %v1398 = vpop.f32.mrb[0].mxu0
    %v1399 = vpop.f32.mrb[0].mxu0
    %1400 = vdwg.mxu0
    %1401 = vmatprep.subr.bf16.mxu0 %v1235
    %1402 = vmatpush1.bf16.msra.mxu0 %v1234
    %1403 = vmatprep.subr.bf16.mxu0 %v1243
    %1404 = vmatpush1.bf16.msra.mxu0 %v1242
    %1405 = vmatprep.subr.bf16.mxu0 %v1251
    %1406 = vmatpush1.bf16.msra.mxu0 %v1250
    %1407 = vmatprep.subr.bf16.mxu0 %v1259
    %1408 = vmatpush1.bf16.msra.mxu0 %v1258
    %1409 = vmatprep.subr.bf16.mxu0 %v1267
    %1410 = vmatpush1.bf16.msra.mxu0 %v1266
    %1411 = vmatprep.subr.bf16.mxu0 %v1275
    %1412 = vmatpush1.bf16.msra.mxu0 %v1274
    %1413 = vmatprep.subr.bf16.mxu0 %v1283
    %1414 = vmatpush1.bf16.msra.mxu0 %v1282
    %1415 = vmatprep.subr.bf16.mxu0 %v1291
    %1416 = vmatpush1.bf16.msra.mxu0 %v1290
    %1417 = vmatprep.subr.bf16.mxu0 0
    %1418 = vmatpush1.bf16.msra.mxu0 0
    %1419 = vmatprep.subr.bf16.mxu0 0
    %1420 = vmatpush1.bf16.msra.mxu0 0
    %1421 = vmatprep.subr.bf16.mxu0 0
    %1422 = vmatpush1.bf16.msra.mxu0 0
    %1423 = vmatprep.subr.bf16.mxu0 0
    %1424 = vmatpush1.bf16.msra.mxu0 0
    %1425 = vmatprep.subr.bf16.mxu0 0
    %1426 = vmatpush1.bf16.msra.mxu0 0
    %1427 = vmatprep.subr.bf16.mxu0 0
    %1428 = vmatpush1.bf16.msra.mxu0 0
    %1429 = vmatprep.subr.bf16.mxu0 0
    %1430 = vmatpush1.bf16.msra.mxu0 0
    %1431 = vmatprep.subr.bf16.mxu0 0
    %1432 = vmatpush1.bf16.msra.mxu0 0
    %1433 = vmatprep.mubr.bf16.mxu0 0
    %1434 = vmatmul.mubr.bf16.gmra.mrb[0].mxu0 %v933
    %v1435 = vpop.f32.mrb[0].mxu0
    %v1436 = vadd.f32 %v1011, %v1435
    %v1437 = vpop.f32.mrb[0].mxu0
    %v1438 = vadd.f32 %v1015, %v1437
    %v1439 = vpop.f32.mrb[0].mxu0
    %v1440 = vpop.f32.mrb[0].mxu0
    %1441 = vdwg.mxu0
    %1442 = vmatprep.subr.bf16.mxu0 %v1237
    %1443 = vmatpush1.bf16.msra.mxu0 %v1236
    %1444 = vmatprep.subr.bf16.mxu0 %v1245
    %1445 = vmatpush1.bf16.msra.mxu0 %v1244
    %1446 = vmatprep.subr.bf16.mxu0 %v1253
    %1447 = vmatpush1.bf16.msra.mxu0 %v1252
    %1448 = vmatprep.subr.bf16.mxu0 %v1261
    %1449 = vmatpush1.bf16.msra.mxu0 %v1260
    %1450 = vmatprep.subr.bf16.mxu0 %v1269
    %1451 = vmatpush1.bf16.msra.mxu0 %v1268
    %1452 = vmatprep.subr.bf16.mxu0 %v1277
    %1453 = vmatpush1.bf16.msra.mxu0 %v1276
    %1454 = vmatprep.subr.bf16.mxu0 %v1285
    %1455 = vmatpush1.bf16.msra.mxu0 %v1284
    %1456 = vmatprep.subr.bf16.mxu0 %v1293
    %1457 = vmatpush1.bf16.msra.mxu0 %v1292
    %1458 = vmatprep.subr.bf16.mxu0 0
    %1459 = vmatpush1.bf16.msra.mxu0 0
    %1460 = vmatprep.subr.bf16.mxu0 0
    %1461 = vmatpush1.bf16.msra.mxu0 0
    %1462 = vmatprep.subr.bf16.mxu0 0
    %1463 = vmatpush1.bf16.msra.mxu0 0
    %1464 = vmatprep.subr.bf16.mxu0 0
    %1465 = vmatpush1.bf16.msra.mxu0 0
    %1466 = vmatprep.subr.bf16.mxu0 0
    %1467 = vmatpush1.bf16.msra.mxu0 0
    %1468 = vmatprep.subr.bf16.mxu0 0
    %1469 = vmatpush1.bf16.msra.mxu0 0
    %1470 = vmatprep.subr.bf16.mxu0 0
    %1471 = vmatpush1.bf16.msra.mxu0 0
    %1472 = vmatprep.subr.bf16.mxu0 0
    %1473 = vmatpush1.bf16.msra.mxu0 0
    %1474 = vmatprep.mubr.bf16.mxu0 0
    %1475 = vmatmul.mubr.bf16.gmra.mrb[0].mxu0 %v933
    %v1476 = vpop.f32.mrb[0].mxu0
    %v1477 = vadd.f32 %v1019, %v1476
    %v1478 = vpop.f32.mrb[0].mxu0
    %v1479 = vadd.f32 %v1023, %v1478
    %v1480 = vpop.f32.mrb[0].mxu0
    %v1481 = vpop.f32.mrb[0].mxu0
    %1482 = vdwg.mxu0
    %1483 = vmatprep.subr.bf16.mxu0 %v1239
    %1484 = vmatpush1.bf16.msra.mxu0 %v1238
    %1485 = vmatprep.subr.bf16.mxu0 %v1247
    %1486 = vmatpush1.bf16.msra.mxu0 %v1246
    %1487 = vmatprep.subr.bf16.mxu0 %v1255
    %1488 = vmatpush1.bf16.msra.mxu0 %v1254
    %1489 = vmatprep.subr.bf16.mxu0 %v1263
    %1490 = vmatpush1.bf16.msra.mxu0 %v1262
    %1491 = vmatprep.subr.bf16.mxu0 %v1271
    %1492 = vmatpush1.bf16.msra.mxu0 %v1270
    %1493 = vmatprep.subr.bf16.mxu0 %v1279
    %1494 = vmatpush1.bf16.msra.mxu0 %v1278
    %1495 = vmatprep.subr.bf16.mxu0 %v1287
    %1496 = vmatpush1.bf16.msra.mxu0 %v1286
    %1497 = vmatprep.subr.bf16.mxu0 %v1295
    %1498 = vmatpush1.bf16.msra.mxu0 %v1294
    %1499 = vmatprep.subr.bf16.mxu0 0
    %1500 = vmatpush1.bf16.msra.mxu0 0
    %1501 = vmatprep.subr.bf16.mxu0 0
    %1502 = vmatpush1.bf16.msra.mxu0 0
    %1503 = vmatprep.subr.bf16.mxu0 0
    %1504 = vmatpush1.bf16.msra.mxu0 0
    %1505 = vmatprep.subr.bf16.mxu0 0
    %1506 = vmatpush1.bf16.msra.mxu0 0
    %1507 = vmatprep.subr.bf16.mxu0 0
    %1508 = vmatpush1.bf16.msra.mxu0 0
    %1509 = vmatprep.subr.bf16.mxu0 0
    %1510 = vmatpush1.bf16.msra.mxu0 0
    %1511 = vmatprep.subr.bf16.mxu0 0
    %1512 = vmatpush1.bf16.msra.mxu0 0
    %1513 = vmatprep.subr.bf16.mxu0 0
    %1514 = vmatpush1.bf16.msra.mxu0 0
    %1515 = vmatprep.mubr.bf16.mxu0 0
    %1516 = vmatmul.mubr.bf16.gmra.mrb[0].mxu0 %v933
    %v1517 = vpop.f32.mrb[0].mxu0
    %v1518 = vadd.f32 %v1027, %v1517
    %v1519 = vpop.f32.mrb[0].mxu0
    %v1520 = vadd.f32 %v1031, %v1519
    %v1521 = vpop.f32.mrb[0].mxu0
    %v1522 = vpop.f32.mrb[0].mxu0
    %1523 = vdwg.mxu0
    %v1524 = vsub.f32 0.0, %v1395
    %v1525 = vsub.f32 0.0, %v1397
    %v1526 = vsub.f32 0.0, %v1436
    %v1527 = vsub.f32 0.0, %v1438
    %v1528 = vsub.f32 0.0, %v1477
    %v1529 = vsub.f32 0.0, %v1479
    %v1530 = vsub.f32 0.0, %v1518
    %v1531 = vsub.f32 0.0, %v1520
    %v1532 = vmul.f32 %v1524, 1.442695
    %v1533 = vpow.pop %v1532
    %v1534 = vmul.f32 %v1525, 1.442695
    %v1535 = vpow.pop %v1534
    %v1536 = vmul.f32 %v1526, 1.442695
    %v1537 = vpow.pop %v1536
    %v1538 = vmul.f32 %v1527, 1.442695
    %v1539 = vpow.pop %v1538
    %v1540 = vmul.f32 %v1528, 1.442695
    %v1541 = vpow.pop %v1540
    %v1542 = vmul.f32 %v1529, 1.442695
    %v1543 = vpow.pop %v1542
    %v1544 = vmul.f32 %v1530, 1.442695
    %v1545 = vpow.pop %v1544
    %v1546 = vmul.f32 %v1531, 1.442695
    %v1547 = vpow.pop %v1546
    %v1548 = vadd.f32 %v1533, 1.0
    %v1549 = vadd.f32 %v1535, 1.0
    %v1550 = vadd.f32 %v1537, 1.0
    %v1551 = vadd.f32 %v1539, 1.0
    %v1552 = vadd.f32 %v1541, 1.0
    %v1553 = vadd.f32 %v1543, 1.0
    %v1554 = vadd.f32 %v1545, 1.0
    %v1555 = vadd.f32 %v1547, 1.0
    %v1556 = vrcp.pop %v1548
    %v1557 = vrcp.pop %v1549
    %v1558 = vrcp.pop %v1550
    %v1559 = vrcp.pop %v1551
    %v1560 = vrcp.pop %v1552
    %v1561 = vrcp.pop %v1553
    %v1562 = vrcp.pop %v1554
    %v1563 = vrcp.pop %v1555
    %v1564 = vpack.c.bf16 %v1556, %v1556
    %v1565 = vpack.c.bf16 %v1557, %v1557
    %v1566 = vpack.c.bf16 %v1558, %v1558
    %v1567 = vpack.c.bf16 %v1559, %v1559
    %v1568 = vpack.c.bf16 %v1560, %v1560
    %v1569 = vpack.c.bf16 %v1561, %v1561
    %v1570 = vpack.c.bf16 %v1562, %v1562
    %v1571 = vpack.c.bf16 %v1563, %v1563
    %v1580 = vunpack.c.l.b16 %v1564
    %v1581 = vunpack.c.l.b16 %v1565
    %v1582 = vunpack.c.l.b16 %v1566
    %v1583 = vunpack.c.l.b16 %v1567
    %v1584 = vunpack.c.l.b16 %v1568
    %v1585 = vunpack.c.l.b16 %v1569
    %v1586 = vunpack.c.l.b16 %v1570
    %v1587 = vunpack.c.l.b16 %v1571
    %v1588 = vpack.c.b16 %v1581, %v1580
    %v1589 = vpack.c.b16 %v1583, %v1582
    %v1590 = vpack.c.b16 %v1585, %v1584
    %v1591 = vpack.c.b16 %v1587, %v1586
    %1596 = vst [vmem:[#allocation10] sm:$0xff] %v1588
    %1597 = vst [vmem:[#allocation10 + $0x8] sm:$0xff] %v1589
    %1598 = vst [vmem:[#allocation10 + $0x10] sm:$0xff] %v1590
    %1599 = vst [vmem:[#allocation10 + $0x18] sm:$0xff] %v1591
    // Predicated region
    $region46: #{tpu_custom_call.1} parent=1 // pred_check
      _
    $region47: #{tpu_custom_call.1} parent=1 // pred_check_branch
      %1601 = sbr.rel (0) target = $region49
    $region48: #{tpu_custom_call.1} parent=1 // pred_region
      %s1603 = ssub.s32 512, 512
      %1604 = vsyncadd [#allocation4], %s1603
      %s1606 = sshll.u32 [#allocation10], 4
      %s1607 = int_to_ptr.vmem [resolvable:$true] %s1606
      %1609 = dma.vmem_to_hbm [thread:$0]  %s1607, 512, %s7, [#allocation4]
    $region49: #{tpu_custom_call.1} parent=1 // pred_fallthru
      _
    // Predicated region
    $region50: #{tpu_custom_call.1} parent=1 // pred_check
      _
    $region51: #{tpu_custom_call.1} parent=1 // pred_check_branch
      %1611 = sbr.rel (0) target = $region53
    $region52: #{tpu_custom_call.1} parent=1 // pred_region
      %s1613 = ssub.s32 64, 64
      %1614 = vsyncadd [#allocation12], %s1613
      %s1616 = sshll.u32 [#allocation11], 4
      %s1617 = int_to_ptr.vmem [resolvable:$true] %s1616
      %1619 = dma.vmem_to_hbm [thread:$0]  %s1617, 64, %s8, [#allocation12]
    $region53: #{tpu_custom_call.1} parent=1 // pred_fallthru
      _
    // Predicated region
    $region54: #{tpu_custom_call.1} parent=1 // pred_check
      _
    $region55: #{tpu_custom_call.1} parent=1 // pred_check_branch
      %1621 = sbr.rel (0) target = $region57
    $region56: #{tpu_custom_call.1} parent=1 // pred_region
      %1622 = dma.done [#allocation4], 512
    $region57: #{tpu_custom_call.1} parent=1 // pred_fallthru
      _
    // Predicated region
    $region58: #{tpu_custom_call.1} parent=1 // pred_check
      _
    $region59: #{tpu_custom_call.1} parent=1 // pred_check_branch
      %1624 = sbr.rel (0) target = $region61
    $region60: #{tpu_custom_call.1} parent=1 // pred_region
      %1625 = dma.done [#allocation12], 64
    $region61: #{tpu_custom_call.1} parent=1 // pred_fallthru
      _
    %1626 = vsyncpa [#allocation3], 1
    %1627 = vsyncpa [#allocation6], 1
    %1628 = vsyncpa [#allocation9], 1
    %1629 = vsyncpa [#allocation4], 1
    %1630 = vsyncpa [#allocation12], 1

</llo_original>
